<compile_context>
chip_gen: v7x
topology: tpu7x:2x2x1
jax: 0.10.0
libtpu: 0.0.40
codegen_flags: <defaults>
</compile_context>

<pallas_src>
import jax
import jax.numpy as jnp
from jax.experimental import pallas as pl
from jax.experimental.pallas import tpu as pltpu

HIDDEN = 32     # nn.Linear(3, hidden_size)  (scaled down from 100 for the test)
SUBSPACE = 32   # subspace_dim               (scaled down from 100 for the test)
LANE = 128      # TPU lane width; batch tiles are multiples of this
BM_MAX = 16384  # per-step batch tile cap (double-buffered IO < 1 MiB VMEM)


def _mlp_kernel(x_ref, w1_ref, b1_ref, w2_ref, b2_ref, w3_ref, b3_ref,
                w4_ref, b4_ref, wo_ref, o_ref):
    # Activation dtype is carried by the layer 2-4 weights: f32 everywhere, or
    # bf16 on v6e/v7x to halve the binding EUP (tanh) slot.
    act_dtype = w2_ref.dtype

    x = x_ref[...]                                    # [3, BM] f32
    w1 = w1_ref[...]                                  # [H, 3]  (PyTorch [out,in])
    # Layer 1 (K=3): VPU broadcast-FMAs instead of a tiny-K MXU push.
    # TODO(synk): x_ref[pl.ds(r, HIDDEN, stride=0), :] sublane-broadcast loads
    # would move the broadcast onto the vld slot; skipped, XLU/VPU have slack.
    pre = (w1[:, 0:1] * x[0:1, :]
           + w1[:, 1:2] * x[1:2, :]
           + w1[:, 2:3] * x[2:3, :]) + b1_ref[...]    # [H, BM] f32
    h = jnp.tanh(pre.astype(act_dtype))               # lane-dense [H, BM]

    # Layers 2-4: lane-dense [out,in] x [in,BM] MXU matmuls, f32 accumulate,
    # bias add in f32, then cast to act_dtype before the (EUP-bound) tanh.
    for w_ref, b_ref in ((w2_ref, b2_ref), (w3_ref, b3_ref), (w4_ref, b4_ref)):
        pre = jnp.dot(w_ref[...], h, preferred_element_type=jnp.float32) \
              + b_ref[...]
        h = jnp.tanh(pre.astype(act_dtype))           # [H|S, BM]

    # Output projection (subspace -> 1, ones-initialized weight kept general):
    # VPU multiply + XLU sublane reduction, avoiding an N=1 MXU push/pop.
    o_ref[...] = jnp.sum(h.astype(jnp.float32) * wo_ref[...],
                         axis=0, keepdims=True)       # [1, BM] f32, lane-dense


def _choose_tiling(n):
    """Return (bm, n_pad): per-step batch tile and padded batch (= bm * steps).

    Pick the tile first, then pad the batch up to a whole number of tiles, so
    unlucky batch sizes never fall back to a long grid of tiny tiles.  The
    step count is kept even (>= 2) so v7x's two TensorCores split the
    'parallel' axis evenly; tiles are as large as possible (cap BM_MAX) to
    amortize the fixed per-grid-step cost.
    """
    n_lane = max(LANE, ((n + LANE - 1) // LANE) * LANE)
    if n_lane <= 2 * LANE:
        # Tiny batches: a single lane-multiple tile (latency regime).
        return n_lane, n_lane
    steps = max(2, -(-n_lane // BM_MAX))
    if steps % 2:
        steps += 1
    bm = -(-n_lane // steps)
    bm = ((bm + LANE - 1) // LANE) * LANE
    return bm, bm * steps


def net_forward(xyt, params, *, use_bf16=False):
    """xyt: [N, 3] float32 -> [N, 1] float32 (matches Net.forward)."""
    w1, b1, w2, b2, w3, b3, w4, b4, wo = params
    n = xyt.shape[0]
    bm, n_pad = _choose_tiling(n)
    grid = (n_pad // bm,)

    # Batch-on-lanes: one fused pad+transpose pass producing [3, n_pad].
    # Padded columns are zeros -> finite garbage in the kernel, sliced off below.
    if n_pad == n:
        x_t = xyt.T
    else:
        x_t = jnp.pad(xyt, ((0, n_pad - n), (0, 0))).T

    act_dtype = jnp.bfloat16 if use_bf16 else jnp.float32

    # Column-vector views of biases / output weight (tiny reshapes); layer 2-4
    # weights pre-cast to the activation dtype (MXU-native bf16 on v6e/v7x).
    # TODO(synk): the 9 tiny weight/bias operands (~5 KB) could be packed into
    # one VMEM slab to trim per-step BlockSpec bookkeeping; minor, skipped.
    b1c = b1.reshape(HIDDEN, 1)
    b2c = b2.reshape(HIDDEN, 1)
    b3c = b3.reshape(HIDDEN, 1)
    b4c = b4.reshape(SUBSPACE, 1)
    woc = wo.reshape(SUBSPACE, 1)
    w2c = w2.astype(act_dtype)
    w3c = w3.astype(act_dtype)
    w4c = w4.astype(act_dtype)

    const = lambda shape: pl.BlockSpec(shape, lambda i: (0, 0))
    out = pl.pallas_call(
        _mlp_kernel,
        out_shape=jax.ShapeDtypeStruct((1, n_pad), jnp.float32),
        grid_spec=pltpu.PrefetchScalarGridSpec(
            num_scalar_prefetch=0,
            grid=grid,
            in_specs=[
                pl.BlockSpec((3, bm), lambda i: (0, i)),          # x tile
                const((HIDDEN, 3)), const((HIDDEN, 1)),           # layer 1
                const((HIDDEN, HIDDEN)), const((HIDDEN, 1)),      # layer 2
                const((HIDDEN, HIDDEN)), const((HIDDEN, 1)),      # layer 3
                const((SUBSPACE, HIDDEN)), const((SUBSPACE, 1)),  # layer 4
                const((SUBSPACE, 1)),                             # output proj
            ],
            out_specs=pl.BlockSpec((1, bm), lambda i: (0, i)),    # lane-dense
        ),
        compiler_params=pltpu.CompilerParams(
            dimension_semantics=("parallel",)),
    )(x_t, w1, b1c, w2c, b2c, w3c, b3c, w4c, b4c, woc)
    return out[0, :n].reshape(n, 1)


def _bf16_act_profitable():
    """bf16 tanh only pays off where the EUP/VPU are bf16-capable (v6e/v7x)."""
    try:
        kind = jax.devices()[0].device_kind.lower()
    except Exception:
        return False
    return any(tag in kind for tag in ("v6", "v7", "trillium"))


def init_params(key):
    """Deterministic init in PyTorch nn.Linear layout: weight [out,in], bias [out]."""
    def linear(k, fan_in, fan_out):
        kw, kb = jax.random.split(k)
        bound = 1.0 / jnp.sqrt(jnp.float32(fan_in))
        w = jax.random.uniform(kw, (fan_out, fan_in), jnp.float32, -bound, bound)
        b = jax.random.uniform(kb, (fan_out,), jnp.float32, -bound, bound)
        return w, b

    k1, k2, k3, k4 = jax.random.split(key, 4)
    w1, b1 = linear(k1, 3, HIDDEN)
    w2, b2 = linear(k2, HIDDEN, HIDDEN)
    w3, b3 = linear(k3, HIDDEN, HIDDEN)
    w4, b4 = linear(k4, HIDDEN, SUBSPACE)
    # self.output.weight.fill_(1.0), bias=False
    wo = jnp.ones((1, SUBSPACE), jnp.float32)
    return (w1, b1, w2, b2, w3, b3, w4, b4, wo)


def reference_forward(xyt, params):
    w1, b1, w2, b2, w3, b3, w4, b4, wo = params
    h = jnp.tanh(xyt @ w1.T + b1)
    h = jnp.tanh(h @ w2.T + b2)
    h = jnp.tanh(h @ w3.T + b3)
    h = jnp.tanh(h @ w4.T + b4)
    return h @ wo.T


if __name__ == "__main__":
    key = jax.random.PRNGKey(0)
    kx, kp = jax.random.split(key)
    N = 1000  # ragged batch: exercises the pad-to-tile path (pads to 1024, grid=2)
    xyt = jax.random.normal(kx, (N, 3), jnp.float32)  # (x, y, t) samples
    params = init_params(kp)
    ref = reference_forward(xyt, params)

    # Exact-semantics f32 path (all generations).
    out = jax.block_until_ready(net_forward(xyt, params, use_bf16=False))
    assert out.shape == (N, 1)
    max_err = jnp.max(jnp.abs(out - ref))
    assert jnp.allclose(out, ref, atol=1e-5, rtol=1e-5), f"f32 max err {max_err}"

    # bf16-activation path: halves the binding EUP (tanh) slot on v6e/v7x.
    # Validated with a relaxed tolerance (bf16 activations, per perf review).
    if _bf16_act_profitable():
        out_bf16 = jax.block_until_ready(net_forward(xyt, params, use_bf16=True))
        bf16_err = jnp.max(jnp.abs(out_bf16 - ref))
        assert bf16_err < 0.25, f"bf16 max err {bf16_err}"

    print("KERNEL_OK")
</pallas_src>

<mosaic_0001>
module attributes {stable_mosaic.version = 11 : i64} {
  func.func @_mlp_kernel(%arg0: i32, %arg1: memref<3x512xf32, #tpu.memory_space<vmem>>, %arg2: memref<32x3xf32, #tpu.memory_space<vmem>>, %arg3: memref<32x1xf32, #tpu.memory_space<vmem>>, %arg4: memref<32x32xf32, #tpu.memory_space<vmem>>, %arg5: memref<32x1xf32, #tpu.memory_space<vmem>>, %arg6: memref<32x32xf32, #tpu.memory_space<vmem>>, %arg7: memref<32x1xf32, #tpu.memory_space<vmem>>, %arg8: memref<32x32xf32, #tpu.memory_space<vmem>>, %arg9: memref<32x1xf32, #tpu.memory_space<vmem>>, %arg10: memref<32x1xf32, #tpu.memory_space<vmem>>, %arg11: memref<1x512xf32, #tpu.memory_space<vmem>>) attributes {dimension_semantics = [#tpu.dimension_semantics<parallel>], iteration_bounds = array<i64: 2>, scalar_prefetch = 0 : i64, scratch_operands = 0 : i64, tpu.core_type = #tpu.core_type<tc>, window_params = [{transform_indices = @transform_0, window_bounds = array<i64: 3, 512>}, {pipeline_mode = #tpu.pipeline_mode<synchronous>, transform_indices = @transform_1, window_bounds = array<i64: 32, 3>}, {pipeline_mode = #tpu.pipeline_mode<synchronous>, transform_indices = @transform_2, window_bounds = array<i64: 32, 1>}, {pipeline_mode = #tpu.pipeline_mode<synchronous>, transform_indices = @transform_3, window_bounds = array<i64: 32, 32>}, {pipeline_mode = #tpu.pipeline_mode<synchronous>, transform_indices = @transform_4, window_bounds = array<i64: 32, 1>}, {pipeline_mode = #tpu.pipeline_mode<synchronous>, transform_indices = @transform_5, window_bounds = array<i64: 32, 32>}, {pipeline_mode = #tpu.pipeline_mode<synchronous>, transform_indices = @transform_6, window_bounds = array<i64: 32, 1>}, {pipeline_mode = #tpu.pipeline_mode<synchronous>, transform_indices = @transform_7, window_bounds = array<i64: 32, 32>}, {pipeline_mode = #tpu.pipeline_mode<synchronous>, transform_indices = @transform_8, window_bounds = array<i64: 32, 1>}, {pipeline_mode = #tpu.pipeline_mode<synchronous>, transform_indices = @transform_9, window_bounds = array<i64: 32, 1>}, {transform_indices = @transform_10, window_bounds = array<i64: 1, 512>}]} {
    %c0 = arith.constant 0 : index
    %c0_0 = arith.constant 0 : index
    %0 = vector.load %arg1[%c0, %c0_0] : memref<3x512xf32, #tpu.memory_space<vmem>>, vector<3x512xf32>
    %c0_1 = arith.constant 0 : index
    %c0_2 = arith.constant 0 : index
    %1 = vector.load %arg2[%c0_1, %c0_2] : memref<32x3xf32, #tpu.memory_space<vmem>>, vector<32x3xf32>
    %2 = vector.extract_strided_slice %1 {offsets = [0, 0], sizes = [32, 1], strides = [1, 1]} : vector<32x3xf32> to vector<32x1xf32>
    %3 = vector.extract_strided_slice %0 {offsets = [0, 0], sizes = [1, 512], strides = [1, 1]} : vector<3x512xf32> to vector<1x512xf32>
    %4 = vector.broadcast %2 : vector<32x1xf32> to vector<32x512xf32>
    %5 = vector.broadcast %3 : vector<1x512xf32> to vector<32x512xf32>
    %6 = arith.mulf %4, %5 : vector<32x512xf32>
    %7 = vector.extract_strided_slice %1 {offsets = [0, 1], sizes = [32, 1], strides = [1, 1]} : vector<32x3xf32> to vector<32x1xf32>
    %8 = vector.extract_strided_slice %0 {offsets = [1, 0], sizes = [1, 512], strides = [1, 1]} : vector<3x512xf32> to vector<1x512xf32>
    %9 = vector.broadcast %7 : vector<32x1xf32> to vector<32x512xf32>
    %10 = vector.broadcast %8 : vector<1x512xf32> to vector<32x512xf32>
    %11 = arith.mulf %9, %10 : vector<32x512xf32>
    %12 = arith.addf %6, %11 : vector<32x512xf32>
    %13 = vector.extract_strided_slice %1 {offsets = [0, 2], sizes = [32, 1], strides = [1, 1]} : vector<32x3xf32> to vector<32x1xf32>
    %14 = vector.extract_strided_slice %0 {offsets = [2, 0], sizes = [1, 512], strides = [1, 1]} : vector<3x512xf32> to vector<1x512xf32>
    %15 = vector.broadcast %13 : vector<32x1xf32> to vector<32x512xf32>
    %16 = vector.broadcast %14 : vector<1x512xf32> to vector<32x512xf32>
    %17 = arith.mulf %15, %16 : vector<32x512xf32>
    %18 = arith.addf %12, %17 : vector<32x512xf32>
    %c0_3 = arith.constant 0 : index
    %c0_4 = arith.constant 0 : index
    %19 = vector.load %arg3[%c0_3, %c0_4] : memref<32x1xf32, #tpu.memory_space<vmem>>, vector<32x1xf32>
    %20 = vector.broadcast %19 : vector<32x1xf32> to vector<32x512xf32>
    %21 = arith.addf %18, %20 : vector<32x512xf32>
    %22 = math.tanh %21 : vector<32x512xf32>
    %c0_5 = arith.constant 0 : index
    %c0_6 = arith.constant 0 : index
    %23 = vector.load %arg4[%c0_5, %c0_6] : memref<32x32xf32, #tpu.memory_space<vmem>>, vector<32x32xf32>
    %cst = arith.constant dense<0.000000e+00> : vector<32x512xf32>
    %24 = tpu.matmul %23, %22, %cst {dimension_numbers = #tpu.dot_dimension_numbers<[1], [0], [0], [1], [0, 0, 1, 1], [], []>} : vector<32x32xf32>, vector<32x512xf32>, vector<32x512xf32> -> vector<32x512xf32>
    %c0_7 = arith.constant 0 : index
    %c0_8 = arith.constant 0 : index
    %25 = vector.load %arg5[%c0_7, %c0_8] : memref<32x1xf32, #tpu.memory_space<vmem>>, vector<32x1xf32>
    %26 = vector.broadcast %25 : vector<32x1xf32> to vector<32x512xf32>
    %27 = arith.addf %24, %26 : vector<32x512xf32>
    %28 = math.tanh %27 : vector<32x512xf32>
    %c0_9 = arith.constant 0 : index
    %c0_10 = arith.constant 0 : index
    %29 = vector.load %arg6[%c0_9, %c0_10] : memref<32x32xf32, #tpu.memory_space<vmem>>, vector<32x32xf32>
    %cst_11 = arith.constant dense<0.000000e+00> : vector<32x512xf32>
    %30 = tpu.matmul %29, %28, %cst_11 {dimension_numbers = #tpu.dot_dimension_numbers<[1], [0], [0], [1], [0, 0, 1, 1], [], []>} : vector<32x32xf32>, vector<32x512xf32>, vector<32x512xf32> -> vector<32x512xf32>
    %c0_12 = arith.constant 0 : index
    %c0_13 = arith.constant 0 : index
    %31 = vector.load %arg7[%c0_12, %c0_13] : memref<32x1xf32, #tpu.memory_space<vmem>>, vector<32x1xf32>
    %32 = vector.broadcast %31 : vector<32x1xf32> to vector<32x512xf32>
    %33 = arith.addf %30, %32 : vector<32x512xf32>
    %34 = math.tanh %33 : vector<32x512xf32>
    %c0_14 = arith.constant 0 : index
    %c0_15 = arith.constant 0 : index
    %35 = vector.load %arg8[%c0_14, %c0_15] : memref<32x32xf32, #tpu.memory_space<vmem>>, vector<32x32xf32>
    %cst_16 = arith.constant dense<0.000000e+00> : vector<32x512xf32>
    %36 = tpu.matmul %35, %34, %cst_16 {dimension_numbers = #tpu.dot_dimension_numbers<[1], [0], [0], [1], [0, 0, 1, 1], [], []>} : vector<32x32xf32>, vector<32x512xf32>, vector<32x512xf32> -> vector<32x512xf32>
    %c0_17 = arith.constant 0 : index
    %c0_18 = arith.constant 0 : index
    %37 = vector.load %arg9[%c0_17, %c0_18] : memref<32x1xf32, #tpu.memory_space<vmem>>, vector<32x1xf32>
    %38 = vector.broadcast %37 : vector<32x1xf32> to vector<32x512xf32>
    %39 = arith.addf %36, %38 : vector<32x512xf32>
    %40 = math.tanh %39 : vector<32x512xf32>
    %c0_19 = arith.constant 0 : index
    %c0_20 = arith.constant 0 : index
    %41 = vector.load %arg10[%c0_19, %c0_20] : memref<32x1xf32, #tpu.memory_space<vmem>>, vector<32x1xf32>
    %42 = vector.broadcast %41 : vector<32x1xf32> to vector<32x512xf32>
    %43 = arith.mulf %40, %42 : vector<32x512xf32>
    %cst_21 = arith.constant dense<0.000000e+00> : vector<512xf32>
    %44 = vector.multi_reduction <add>, %43, %cst_21 [0] : vector<32x512xf32> to vector<512xf32>
    %45 = vector.shape_cast %44 : vector<512xf32> to vector<1x512xf32>
    %c0_22 = arith.constant 0 : index
    %c0_23 = arith.constant 0 : index
    %46 = vector.load %arg11[%c0_22, %c0_23] : memref<1x512xf32, #tpu.memory_space<vmem>>, vector<1x512xf32>
    tpu.vector_store %arg11[%c0_22, %c0_23], %45 {strides = array<i32>} : memref<1x512xf32, #tpu.memory_space<vmem>>, vector<1x512xf32>,
    return
  }
  func.func @transform_0(%arg0: i32) -> (i32, i32) {
    %c0_i32 = arith.constant 0 : i32
    %c0_i32_0 = arith.constant 0 : i32
    return %c0_i32, %arg0 : i32, i32
  }
  func.func @transform_1(%arg0: i32) -> (i32, i32) {
    %c0_i32 = arith.constant 0 : i32
    %c0_i32_0 = arith.constant 0 : i32
    %c0_i32_1 = arith.constant 0 : i32
    return %c0_i32, %c0_i32_0 : i32, i32
  }
  func.func @transform_2(%arg0: i32) -> (i32, i32) {
    %c0_i32 = arith.constant 0 : i32
    %c0_i32_0 = arith.constant 0 : i32
    %c0_i32_1 = arith.constant 0 : i32
    return %c0_i32, %c0_i32_0 : i32, i32
  }
  func.func @transform_3(%arg0: i32) -> (i32, i32) {
    %c0_i32 = arith.constant 0 : i32
    %c0_i32_0 = arith.constant 0 : i32
    %c0_i32_1 = arith.constant 0 : i32
    return %c0_i32, %c0_i32_0 : i32, i32
  }
  func.func @transform_4(%arg0: i32) -> (i32, i32) {
    %c0_i32 = arith.constant 0 : i32
    %c0_i32_0 = arith.constant 0 : i32
    %c0_i32_1 = arith.constant 0 : i32
    return %c0_i32, %c0_i32_0 : i32, i32
  }
  func.func @transform_5(%arg0: i32) -> (i32, i32) {
    %c0_i32 = arith.constant 0 : i32
    %c0_i32_0 = arith.constant 0 : i32
    %c0_i32_1 = arith.constant 0 : i32
    return %c0_i32, %c0_i32_0 : i32, i32
  }
  func.func @transform_6(%arg0: i32) -> (i32, i32) {
    %c0_i32 = arith.constant 0 : i32
    %c0_i32_0 = arith.constant 0 : i32
    %c0_i32_1 = arith.constant 0 : i32
    return %c0_i32, %c0_i32_0 : i32, i32
  }
  func.func @transform_7(%arg0: i32) -> (i32, i32) {
    %c0_i32 = arith.constant 0 : i32
    %c0_i32_0 = arith.constant 0 : i32
    %c0_i32_1 = arith.constant 0 : i32
    return %c0_i32, %c0_i32_0 : i32, i32
  }
  func.func @transform_8(%arg0: i32) -> (i32, i32) {
    %c0_i32 = arith.constant 0 : i32
    %c0_i32_0 = arith.constant 0 : i32
    %c0_i32_1 = arith.constant 0 : i32
    return %c0_i32, %c0_i32_0 : i32, i32
  }
  func.func @transform_9(%arg0: i32) -> (i32, i32) {
    %c0_i32 = arith.constant 0 : i32
    %c0_i32_0 = arith.constant 0 : i32
    %c0_i32_1 = arith.constant 0 : i32
    return %c0_i32, %c0_i32_0 : i32, i32
  }
  func.func @transform_10(%arg0: i32) -> (i32, i32) {
    %c0_i32 = arith.constant 0 : i32
    %c0_i32_0 = arith.constant 0 : i32
    return %c0_i32, %arg0 : i32, i32
  }
}

</mosaic_0001>

<llo_original>
// kernel: tpu_custom_call.1
$region0: #{tpu_custom_call.1}
  #allocation0 [shape = 'u32[]', space=smem, size = 0x4, offset = 0x4, fixed_abs, tag = 'smem constant byte address 0x4 - core index']
  #allocation1 [shape = 'u32[144,128]{1,0:T(1,128)}', space=vmem, size = 0x12000, scoped, tag = 'internal scratch']
  %s0 = inlined_call_operand.vmem [shape: f32[3,1024], index: 0, kind: input, shape index: {}]
  %s1 = inlined_call_operand.vmem [shape: f32[32,3], index: 1, kind: input, shape index: {}]
  %s2 = inlined_call_operand.vmem [shape: f32[32,1], index: 2, kind: input, shape index: {}]
  %s3 = inlined_call_operand.vmem [shape: f32[32,32], index: 3, kind: input, shape index: {}]
  %s4 = inlined_call_operand.vmem [shape: f32[32,1], index: 4, kind: input, shape index: {}]
  %s5 = inlined_call_operand.vmem [shape: f32[32,32], index: 5, kind: input, shape index: {}]
  %s6 = inlined_call_operand.vmem [shape: f32[32,1], index: 6, kind: input, shape index: {}]
  %s7 = inlined_call_operand.vmem [shape: f32[32,32], index: 7, kind: input, shape index: {}]
  %s8 = inlined_call_operand.vmem [shape: f32[32,1], index: 8, kind: input, shape index: {}]
  %s9 = inlined_call_operand.vmem [shape: f32[32,1], index: 9, kind: input, shape index: {}]
  %s10 = inlined_call_operand.hbm [shape: f32[1,1024], index: 10, kind: output, shape index: {}]
  %s11 = sld [smem:[#allocation0]]
  $region73: #{tpu_custom_call.1} parent=0
    _
  %s13 = ssub.s32 1, %s11
  %s14 = scalar_select 0, %s13, %s11
  $region1: #{tpu_custom_call.1} parent=0
    #allocation2 [shape = 'u8[4096]{0}', space=vmem, size = 0x1000, scoped, tag = 'output window, operand 0']
    #allocation3 [shape = 's32[2]{0}', space=sflag, size = 0x8, scoped, tag = 'scoped memory for tpu_custom_call.1']
    %15 = vsyncpa [#allocation3], 0
    %s16 = scalar_lea.sflag [#allocation3], 1
    %17 = vsyncpa %s16, 0
    loop: start=0, step=1, limit=4
    $region2: #{tpu_custom_call.1} parent=1 // loop_pre_header
      _
    $region3: #{tpu_custom_call.1} parent=1 // loop_header
      %s19 = sphi 0, %s23
      %p20 = scmp.ge.s32.totalorder %s19, 4
      %s29 = sphi 0, %s31
      %s32 = sphi 0, %s29
      %s33 = sphi 0, %s32
      %s49 = sphi 0, %s33
      %s53 = sphi 0, %s53
      %s55 = sphi 0, %s53
      %s56 = sphi 0, %s55
      %s70 = sphi 0, %s56
      %s74 = sphi 0, %s74
      %s76 = sphi 0, %s74
      %s77 = sphi 0, %s76
      %s91 = sphi 0, %s77
      %s95 = sphi 0, %s95
      %s97 = sphi 0, %s95
      %s98 = sphi 0, %s97
      %s112 = sphi 0, %s98
      %s116 = sphi 0, %s116
      %s118 = sphi 0, %s116
      %s119 = sphi 0, %s118
      %s133 = sphi 0, %s119
      %s137 = sphi 0, %s137
      %s139 = sphi 0, %s137
      %s140 = sphi 0, %s139
      %s154 = sphi 0, %s140
      %s158 = sphi 0, %s158
      %s160 = sphi 0, %s158
      %s161 = sphi 0, %s160
      %s175 = sphi 0, %s161
      %s179 = sphi 0, %s179
      %s181 = sphi 0, %s179
      %s182 = sphi 0, %s181
      %s196 = sphi 0, %s182
      %s200 = sphi 0, %s200
      %s202 = sphi 0, %s200
      %s203 = sphi 0, %s202
      %s217 = sphi 0, %s203
      %s221 = sphi 0, %s221
      %s223 = sphi 0, %s221
      %s224 = sphi 0, %s223
      %s238 = sphi 0, %s224
      %s244 = sphi 0, %s246
      %s247 = sphi 0, %s244
      %s248 = sphi 0, %s247
      %s264 = sphi 0, %s248
    $region4: #{tpu_custom_call.1} parent=1 // loop_header_branch
      %22 = sbr.rel (%p20) target = $region8
    $region5: #{tpu_custom_call.1} parent=1 // loop_body
      %s24 = ssub.s32 %s19, 1
      %s25 = ssub.s32 %s19, 2
      %s26 = sadd.s32 %s19, 1
      %s27 = ssub.s32 %s19, %s26
      %p28 = scmp.eq.s32.totalorder %s27, 0
      %s30 = sadd.s32 %s29, 1
      %s31 = scalar_select %p28, %s29, %s30
      %p34 = pneg %p28
      %p35 = scmp.eq.s32.totalorder %s19, 1
      %p36 = por %p34, %p35
      %p37 = scmp.ne.s32.totalorder %s29, %s32
      %p38 = scmp.eq.s32.totalorder %s19, 0
      %p39 = por %p37, %p38
      %p40 = scmp.ne.s32.totalorder %s29, %s32
      %p41 = scmp.eq.s32.totalorder %s24, 1
      %p42 = por %p40, %p41
      %p43 = scmp.ne.s32.totalorder %s32, %s33
      %p44 = scmp.eq.s32.totalorder %s24, 0
      %p45 = por %p43, %p44
      %p46 = scmp.ne.s32.totalorder %s32, %s33
      %p47 = scmp.eq.s32.totalorder %s25, 1
      %p48 = por %p46, %p47
      %p50 = scmp.ne.s32.totalorder %s33, %s49
      %p51 = scmp.eq.s32.totalorder %s25, 0
      %p52 = por %p50, %p51
      %s54 = sadd.s32 %s53, 1
      %p57 = scmp.eq.s32.totalorder %s19, 1
      %p58 = scmp.ne.s32.totalorder %s53, %s55
      %p59 = scmp.eq.s32.totalorder %s19, 0
      %p60 = por %p58, %p59
      %p61 = scmp.ne.s32.totalorder %s53, %s55
      %p62 = scmp.eq.s32.totalorder %s24, 1
      %p63 = por %p61, %p62
      %p64 = scmp.ne.s32.totalorder %s55, %s56
      %p65 = scmp.eq.s32.totalorder %s24, 0
      %p66 = por %p64, %p65
      %p67 = scmp.ne.s32.totalorder %s55, %s56
      %p68 = scmp.eq.s32.totalorder %s25, 1
      %p69 = por %p67, %p68
      %p71 = scmp.ne.s32.totalorder %s56, %s70
      %p72 = scmp.eq.s32.totalorder %s25, 0
      %p73 = por %p71, %p72
      %s75 = sadd.s32 %s74, 1
      %p78 = scmp.eq.s32.totalorder %s19, 1
      %p79 = scmp.ne.s32.totalorder %s74, %s76
      %p80 = scmp.eq.s32.totalorder %s19, 0
      %p81 = por %p79, %p80
      %p82 = scmp.ne.s32.totalorder %s74, %s76
      %p83 = scmp.eq.s32.totalorder %s24, 1
      %p84 = por %p82, %p83
      %p85 = scmp.ne.s32.totalorder %s76, %s77
      %p86 = scmp.eq.s32.totalorder %s24, 0
      %p87 = por %p85, %p86
      %p88 = scmp.ne.s32.totalorder %s76, %s77
      %p89 = scmp.eq.s32.totalorder %s25, 1
      %p90 = por %p88, %p89
      %p92 = scmp.ne.s32.totalorder %s77, %s91
      %p93 = scmp.eq.s32.totalorder %s25, 0
      %p94 = por %p92, %p93
      %s96 = sadd.s32 %s95, 1
      %p99 = scmp.eq.s32.totalorder %s19, 1
      %p100 = scmp.ne.s32.totalorder %s95, %s97
      %p101 = scmp.eq.s32.totalorder %s19, 0
      %p102 = por %p100, %p101
      %p103 = scmp.ne.s32.totalorder %s95, %s97
      %p104 = scmp.eq.s32.totalorder %s24, 1
      %p105 = por %p103, %p104
      %p106 = scmp.ne.s32.totalorder %s97, %s98
      %p107 = scmp.eq.s32.totalorder %s24, 0
      %p108 = por %p106, %p107
      %p109 = scmp.ne.s32.totalorder %s97, %s98
      %p110 = scmp.eq.s32.totalorder %s25, 1
      %p111 = por %p109, %p110
      %p113 = scmp.ne.s32.totalorder %s98, %s112
      %p114 = scmp.eq.s32.totalorder %s25, 0
      %p115 = por %p113, %p114
      %s117 = sadd.s32 %s116, 1
      %p120 = scmp.eq.s32.totalorder %s19, 1
      %p121 = scmp.ne.s32.totalorder %s116, %s118
      %p122 = scmp.eq.s32.totalorder %s19, 0
      %p123 = por %p121, %p122
      %p124 = scmp.ne.s32.totalorder %s116, %s118
      %p125 = scmp.eq.s32.totalorder %s24, 1
      %p126 = por %p124, %p125
      %p127 = scmp.ne.s32.totalorder %s118, %s119
      %p128 = scmp.eq.s32.totalorder %s24, 0
      %p129 = por %p127, %p128
      %p130 = scmp.ne.s32.totalorder %s118, %s119
      %p131 = scmp.eq.s32.totalorder %s25, 1
      %p132 = por %p130, %p131
      %p134 = scmp.ne.s32.totalorder %s119, %s133
      %p135 = scmp.eq.s32.totalorder %s25, 0
      %p136 = por %p134, %p135
      %s138 = sadd.s32 %s137, 1
      %p141 = scmp.eq.s32.totalorder %s19, 1
      %p142 = scmp.ne.s32.totalorder %s137, %s139
      %p143 = scmp.eq.s32.totalorder %s19, 0
      %p144 = por %p142, %p143
      %p145 = scmp.ne.s32.totalorder %s137, %s139
      %p146 = scmp.eq.s32.totalorder %s24, 1
      %p147 = por %p145, %p146
      %p148 = scmp.ne.s32.totalorder %s139, %s140
      %p149 = scmp.eq.s32.totalorder %s24, 0
      %p150 = por %p148, %p149
      %p151 = scmp.ne.s32.totalorder %s139, %s140
      %p152 = scmp.eq.s32.totalorder %s25, 1
      %p153 = por %p151, %p152
      %p155 = scmp.ne.s32.totalorder %s140, %s154
      %p156 = scmp.eq.s32.totalorder %s25, 0
      %p157 = por %p155, %p156
      %s159 = sadd.s32 %s158, 1
      %p162 = scmp.eq.s32.totalorder %s19, 1
      %p163 = scmp.ne.s32.totalorder %s158, %s160
      %p164 = scmp.eq.s32.totalorder %s19, 0
      %p165 = por %p163, %p164
      %p166 = scmp.ne.s32.totalorder %s158, %s160
      %p167 = scmp.eq.s32.totalorder %s24, 1
      %p168 = por %p166, %p167
      %p169 = scmp.ne.s32.totalorder %s160, %s161
      %p170 = scmp.eq.s32.totalorder %s24, 0
      %p171 = por %p169, %p170
      %p172 = scmp.ne.s32.totalorder %s160, %s161
      %p173 = scmp.eq.s32.totalorder %s25, 1
      %p174 = por %p172, %p173
      %p176 = scmp.ne.s32.totalorder %s161, %s175
      %p177 = scmp.eq.s32.totalorder %s25, 0
      %p178 = por %p176, %p177
      %s180 = sadd.s32 %s179, 1
      %p183 = scmp.eq.s32.totalorder %s19, 1
      %p184 = scmp.ne.s32.totalorder %s179, %s181
      %p185 = scmp.eq.s32.totalorder %s19, 0
      %p186 = por %p184, %p185
      %p187 = scmp.ne.s32.totalorder %s179, %s181
      %p188 = scmp.eq.s32.totalorder %s24, 1
      %p189 = por %p187, %p188
      %p190 = scmp.ne.s32.totalorder %s181, %s182
      %p191 = scmp.eq.s32.totalorder %s24, 0
      %p192 = por %p190, %p191
      %p193 = scmp.ne.s32.totalorder %s181, %s182
      %p194 = scmp.eq.s32.totalorder %s25, 1
      %p195 = por %p193, %p194
      %p197 = scmp.ne.s32.totalorder %s182, %s196
      %p198 = scmp.eq.s32.totalorder %s25, 0
      %p199 = por %p197, %p198
      %s201 = sadd.s32 %s200, 1
      %p204 = scmp.eq.s32.totalorder %s19, 1
      %p205 = scmp.ne.s32.totalorder %s200, %s202
      %p206 = scmp.eq.s32.totalorder %s19, 0
      %p207 = por %p205, %p206
      %p208 = scmp.ne.s32.totalorder %s200, %s202
      %p209 = scmp.eq.s32.totalorder %s24, 1
      %p210 = por %p208, %p209
      %p211 = scmp.ne.s32.totalorder %s202, %s203
      %p212 = scmp.eq.s32.totalorder %s24, 0
      %p213 = por %p211, %p212
      %p214 = scmp.ne.s32.totalorder %s202, %s203
      %p215 = scmp.eq.s32.totalorder %s25, 1
      %p216 = por %p214, %p215
      %p218 = scmp.ne.s32.totalorder %s203, %s217
      %p219 = scmp.eq.s32.totalorder %s25, 0
      %p220 = por %p218, %p219
      %s222 = sadd.s32 %s221, 1
      %p225 = scmp.eq.s32.totalorder %s19, 1
      %p226 = scmp.ne.s32.totalorder %s221, %s223
      %p227 = scmp.eq.s32.totalorder %s19, 0
      %p228 = por %p226, %p227
      %p229 = scmp.ne.s32.totalorder %s221, %s223
      %p230 = scmp.eq.s32.totalorder %s24, 1
      %p231 = por %p229, %p230
      %p232 = scmp.ne.s32.totalorder %s223, %s224
      %p233 = scmp.eq.s32.totalorder %s24, 0
      %p234 = por %p232, %p233
      %p235 = scmp.ne.s32.totalorder %s223, %s224
      %p236 = scmp.eq.s32.totalorder %s25, 1
      %p237 = por %p235, %p236
      %p239 = scmp.ne.s32.totalorder %s224, %s238
      %p240 = scmp.eq.s32.totalorder %s25, 0
      %p241 = por %p239, %p240
      %s242 = ssub.s32 %s19, %s26
      %p243 = scmp.eq.s32.totalorder %s242, 0
      %s245 = sadd.s32 %s244, 1
      %s246 = scalar_select %p243, %s244, %s245
      %p249 = pneg %p243
      %p250 = scmp.eq.s32.totalorder %s19, 1
      %p251 = por %p249, %p250
      %p252 = scmp.ne.s32.totalorder %s244, %s247
      %p253 = scmp.eq.s32.totalorder %s19, 0
      %p254 = por %p252, %p253
      %p255 = scmp.ne.s32.totalorder %s244, %s247
      %p256 = scmp.eq.s32.totalorder %s24, 1
      %p257 = por %p255, %p256
      %p258 = scmp.ne.s32.totalorder %s247, %s248
      %p259 = scmp.eq.s32.totalorder %s24, 0
      %p260 = por %p258, %p259
      %p261 = scmp.ne.s32.totalorder %s247, %s248
      %p262 = scmp.eq.s32.totalorder %s25, 1
      %p263 = por %p261, %p262
      %p265 = scmp.ne.s32.totalorder %s248, %s264
      %p266 = scmp.eq.s32.totalorder %s25, 0
      %p267 = por %p265, %p266
      %p268 = scmp.le.s32.totalorder 1, %s19
      %p269 = scmp.lt.s32.totalorder %s19, 3
      %p270 = pnand %p268, %p269
      %p271 = pneg %p270
      // Predicated region
      $region9: #{tpu_custom_call.1} parent=5 // pred_check
        _
      $region10: #{tpu_custom_call.1} parent=5 // pred_check_branch
        %273 = sbr.rel (%p270) target = $region12
      $region11: #{tpu_custom_call.1} parent=5 // pred_region
        %s274 = ssub.s32 %s19, 1
        // Predicated region
        $region13: #{tpu_custom_call.1} parent=11 // pred_check
          %p275 = pneg %p66
        $region14: #{tpu_custom_call.1} parent=11 // pred_check_branch
          %277 = sbr.rel (%p275) target = $region16
        $region15: #{tpu_custom_call.1} parent=11 // pred_region
          _
        $region16: #{tpu_custom_call.1} parent=11 // pred_fallthru
          _
        // Predicated region
        $region17: #{tpu_custom_call.1} parent=11 // pred_check
          %p278 = pneg %p87
        $region18: #{tpu_custom_call.1} parent=11 // pred_check_branch
          %280 = sbr.rel (%p278) target = $region20
        $region19: #{tpu_custom_call.1} parent=11 // pred_region
          _
        $region20: #{tpu_custom_call.1} parent=11 // pred_fallthru
          _
        // Predicated region
        $region21: #{tpu_custom_call.1} parent=11 // pred_check
          %p281 = pneg %p108
        $region22: #{tpu_custom_call.1} parent=11 // pred_check_branch
          %283 = sbr.rel (%p281) target = $region24
        $region23: #{tpu_custom_call.1} parent=11 // pred_region
          _
        $region24: #{tpu_custom_call.1} parent=11 // pred_fallthru
          _
        // Predicated region
        $region25: #{tpu_custom_call.1} parent=11 // pred_check
          %p284 = pneg %p129
        $region26: #{tpu_custom_call.1} parent=11 // pred_check_branch
          %286 = sbr.rel (%p284) target = $region28
        $region27: #{tpu_custom_call.1} parent=11 // pred_region
          _
        $region28: #{tpu_custom_call.1} parent=11 // pred_fallthru
          _
        // Predicated region
        $region29: #{tpu_custom_call.1} parent=11 // pred_check
          %p287 = pneg %p150
        $region30: #{tpu_custom_call.1} parent=11 // pred_check_branch
          %289 = sbr.rel (%p287) target = $region32
        $region31: #{tpu_custom_call.1} parent=11 // pred_region
          _
        $region32: #{tpu_custom_call.1} parent=11 // pred_fallthru
          _
        // Predicated region
        $region33: #{tpu_custom_call.1} parent=11 // pred_check
          %p290 = pneg %p171
        $region34: #{tpu_custom_call.1} parent=11 // pred_check_branch
          %292 = sbr.rel (%p290) target = $region36
        $region35: #{tpu_custom_call.1} parent=11 // pred_region
          _
        $region36: #{tpu_custom_call.1} parent=11 // pred_fallthru
          _
        // Predicated region
        $region37: #{tpu_custom_call.1} parent=11 // pred_check
          %p293 = pneg %p192
        $region38: #{tpu_custom_call.1} parent=11 // pred_check_branch
          %295 = sbr.rel (%p293) target = $region40
        $region39: #{tpu_custom_call.1} parent=11 // pred_region
          _
        $region40: #{tpu_custom_call.1} parent=11 // pred_fallthru
          _
        // Predicated region
        $region41: #{tpu_custom_call.1} parent=11 // pred_check
          %p296 = pneg %p213
        $region42: #{tpu_custom_call.1} parent=11 // pred_check_branch
          %298 = sbr.rel (%p296) target = $region44
        $region43: #{tpu_custom_call.1} parent=11 // pred_region
          _
        $region44: #{tpu_custom_call.1} parent=11 // pred_fallthru
          _
        // Predicated region
        $region45: #{tpu_custom_call.1} parent=11 // pred_check
          %p299 = pneg %p234
        $region46: #{tpu_custom_call.1} parent=11 // pred_check_branch
          %301 = sbr.rel (%p299) target = $region48
        $region47: #{tpu_custom_call.1} parent=11 // pred_region
          _
        $region48: #{tpu_custom_call.1} parent=11 // pred_fallthru
          _
      $region12: #{tpu_custom_call.1} parent=5 // pred_fallthru
        _
      %p302 = scmp.lt.s32.totalorder %s19, 2
      // Predicated region
      $region49: #{tpu_custom_call.1} parent=5 // pred_check
        %p303 = pneg %p302
      $region50: #{tpu_custom_call.1} parent=5 // pred_check_branch
        %305 = sbr.rel (%p303) target = $region52
      $region51: #{tpu_custom_call.1} parent=5 // pred_region
        // Predicated region
        $region53: #{tpu_custom_call.1} parent=51 // pred_check
          %p306 = pneg %p39
        $region54: #{tpu_custom_call.1} parent=51 // pred_check_branch
          %308 = sbr.rel (%p306) target = $region56
        $region55: #{tpu_custom_call.1} parent=51 // pred_region
          %s309 = smul.u32 4, %s19
          %p310 = scmp.lt.s32.totalorder %s309, 7
          %s311 = scalar_select %p310, %s309, 7
          %s312 = smul.addr %s311, 4
          %s313 = scalar_lea.vmem %s0, %s312
          %s314 = smul.u32 4, %s19
        $region56: #{tpu_custom_call.1} parent=51 // pred_fallthru
          _
      $region52: #{tpu_custom_call.1} parent=5 // pred_fallthru
        _
      %p315 = scmp.le.s32.totalorder 1, %s19
      %p316 = scmp.lt.s32.totalorder %s19, 3
      %p317 = pnand %p315, %p316
      %p318 = pneg %p317
      // Predicated region
      $region57: #{tpu_custom_call.1} parent=5 // pred_check
        _
      $region58: #{tpu_custom_call.1} parent=5 // pred_check_branch
        %320 = sbr.rel (%p317) target = $region60
      $region59: #{tpu_custom_call.1} parent=5 // pred_region
        %s321 = ssub.s32 %s19, 1
        %s322 = smul.u32 4, %s24
        %p323 = scmp.lt.s32.totalorder %s322, 7
        %s324 = scalar_select %p323, %s322, 7
        %s325 = smul.addr %s324, 4
        %s326 = scalar_lea.vmem %s0, %s325
        %p327 = pneg %p45
        %p328 = pneg %p42
        %p329 = pneg %p66
        %p330 = pneg %p63
        %p331 = pneg %p87
        %p332 = pneg %p84
        %p333 = pneg %p108
        %p334 = pneg %p105
        %p335 = pneg %p129
        %p336 = pneg %p126
        %p337 = pneg %p150
        %p338 = pneg %p147
        %p339 = pneg %p171
        %p340 = pneg %p168
        %p341 = pneg %p192
        %p342 = pneg %p189
        %p343 = pneg %p213
        %p344 = pneg %p210
        %p345 = pneg %p234
        %p346 = pneg %p231
        %p347 = pneg %p260
        %p348 = pneg %p257
        %s349 = sand.u32 %s247, 1
        %s350 = scalar_lea.sflag [#allocation3], %s349
        %s351 = sand.u32 %s247, 1
        %s352 = smul.addr %s351, 4
        %s353 = scalar_lea.vmem [#allocation2], %s352
        %s354 = smul.u32 4, %s24
        %p355 = scmp.lt.s32.totalorder %s354, 7
        %s356 = scalar_select %p355, %s354, 7
        %s357 = smul.addr %s356, 4
        %s358 = scalar_lea.vmem %s0, %s357
        %s359 = smul.u32 4, %s24
        %s360 = smul.u32 4, %s24
        %v361 = vld [vmem:[%s358] sm:$0x77]
        %v362 = vld [vmem:[%s358 + $0x8] sm:$0x77]
        %v363 = vld [vmem:[%s1] sm:$0xff]
        %v364 = vld [vmem:[%s1 + $0x8] sm:$0xff]
        %v365 = vld [vmem:[%s1 + $0x10] sm:$0xff]
        %v366 = vld [vmem:[%s1 + $0x18] sm:$0xff]
        %368 = vset.pattern.permute.xlu0 0
        %369 = vperm.xlu0 %368, %v363
        %v370 = vpop.permute.xlu0 %369
        %373 = vset.pattern.permute.xlu0 0
        %374 = vperm.xlu0 %373, %v364
        %v375 = vpop.permute.xlu0 %374
        %378 = vset.pattern.permute.xlu0 0
        %379 = vperm.xlu0 %378, %v365
        %v380 = vpop.permute.xlu0 %379
        %383 = vset.pattern.permute.xlu0 0
        %384 = vperm.xlu0 %383, %v366
        %v385 = vpop.permute.xlu0 %384
        %v389 = vlaneseq
        %v390 = vshrl.u32 %v389, 7
        %v391 = vsub.s32 0, %v390
        %v392 = vrot.slane %v361, %v391
        %v393 = vlaneseq
        %v394 = vshrl.u32 %v393, 7
        %v395 = vsub.s32 4, %v394
        %v396 = vrot.slane %v361, %v395
        %v397 = vlaneseq
        %v398 = vshrl.u32 %v397, 7
        %v399 = vsub.s32 0, %v398
        %v400 = vrot.slane %v362, %v399
        %v401 = vlaneseq
        %v402 = vshrl.u32 %v401, 7
        %v403 = vsub.s32 4, %v402
        %v404 = vrot.slane %v362, %v403
        %v409 = vlaneseq
        %v410 = vshrl.u32 %v409, 7
        %v411 = vsub.s32 0, %v410
        %v412 = vrot.slane %v392, %v411
        %v413 = vlaneseq
        %v414 = vshrl.u32 %v413, 7
        %v415 = vsub.s32 0, %v414
        %v416 = vrot.slane %v396, %v415
        %v417 = vlaneseq
        %v418 = vshrl.u32 %v417, 7
        %v419 = vsub.s32 0, %v418
        %v420 = vrot.slane %v400, %v419
        %v421 = vlaneseq
        %v422 = vshrl.u32 %v421, 7
        %v423 = vsub.s32 0, %v422
        %v424 = vrot.slane %v404, %v423
        %v425 = vmul.f32 %v370, %v412
        %v426 = vmul.f32 %v370, %v416
        %v427 = vmul.f32 %v370, %v420
        %v428 = vmul.f32 %v370, %v424
        %v429 = vmul.f32 %v375, %v412
        %v430 = vmul.f32 %v375, %v416
        %v431 = vmul.f32 %v375, %v420
        %v432 = vmul.f32 %v375, %v424
        %v433 = vmul.f32 %v380, %v412
        %v434 = vmul.f32 %v380, %v416
        %v435 = vmul.f32 %v380, %v420
        %v436 = vmul.f32 %v380, %v424
        %v437 = vmul.f32 %v385, %v412
        %v438 = vmul.f32 %v385, %v416
        %v439 = vmul.f32 %v385, %v420
        %v440 = vmul.f32 %v385, %v424
        %441 = vset.pattern.permute.xlu0 1
        %442 = vperm.xlu0 %441, %v363
        %v443 = vpop.permute.xlu0 %442
        %445 = vset.pattern.permute.xlu0 1
        %446 = vperm.xlu0 %445, %v364
        %v447 = vpop.permute.xlu0 %446
        %449 = vset.pattern.permute.xlu0 1
        %450 = vperm.xlu0 %449, %v365
        %v451 = vpop.permute.xlu0 %450
        %453 = vset.pattern.permute.xlu0 1
        %454 = vperm.xlu0 %453, %v366
        %v455 = vpop.permute.xlu0 %454
        %v457 = vlaneseq
        %v458 = vshrl.u32 %v457, 7
        %v459 = vsub.s32 1, %v458
        %v460 = vrot.slane %v361, %v459
        %v461 = vlaneseq
        %v462 = vshrl.u32 %v461, 7
        %v463 = vsub.s32 5, %v462
        %v464 = vrot.slane %v361, %v463
        %v465 = vlaneseq
        %v466 = vshrl.u32 %v465, 7
        %v467 = vsub.s32 1, %v466
        %v468 = vrot.slane %v362, %v467
        %v469 = vlaneseq
        %v470 = vshrl.u32 %v469, 7
        %v471 = vsub.s32 5, %v470
        %v472 = vrot.slane %v362, %v471
        %v477 = vlaneseq
        %v478 = vshrl.u32 %v477, 7
        %v479 = vsub.s32 1, %v478
        %v480 = vrot.slane %v460, %v479
        %v481 = vlaneseq
        %v482 = vshrl.u32 %v481, 7
        %v483 = vsub.s32 1, %v482
        %v484 = vrot.slane %v464, %v483
        %v485 = vlaneseq
        %v486 = vshrl.u32 %v485, 7
        %v487 = vsub.s32 1, %v486
        %v488 = vrot.slane %v468, %v487
        %v489 = vlaneseq
        %v490 = vshrl.u32 %v489, 7
        %v491 = vsub.s32 1, %v490
        %v492 = vrot.slane %v472, %v491
        %v493 = vmul.f32 %v443, %v480
        %v494 = vmul.f32 %v443, %v484
        %v495 = vmul.f32 %v443, %v488
        %v496 = vmul.f32 %v443, %v492
        %v497 = vmul.f32 %v447, %v480
        %v498 = vmul.f32 %v447, %v484
        %v499 = vmul.f32 %v447, %v488
        %v500 = vmul.f32 %v447, %v492
        %v501 = vmul.f32 %v451, %v480
        %v502 = vmul.f32 %v451, %v484
        %v503 = vmul.f32 %v451, %v488
        %v504 = vmul.f32 %v451, %v492
        %v505 = vmul.f32 %v455, %v480
        %v506 = vmul.f32 %v455, %v484
        %v507 = vmul.f32 %v455, %v488
        %v508 = vmul.f32 %v455, %v492
        %v509 = vadd.f32 %v425, %v493
        %v510 = vadd.f32 %v426, %v494
        %v511 = vadd.f32 %v427, %v495
        %v512 = vadd.f32 %v428, %v496
        %v513 = vadd.f32 %v429, %v497
        %v514 = vadd.f32 %v430, %v498
        %v515 = vadd.f32 %v431, %v499
        %v516 = vadd.f32 %v432, %v500
        %v517 = vadd.f32 %v433, %v501
        %v518 = vadd.f32 %v434, %v502
        %v519 = vadd.f32 %v435, %v503
        %v520 = vadd.f32 %v436, %v504
        %v521 = vadd.f32 %v437, %v505
        %v522 = vadd.f32 %v438, %v506
        %v523 = vadd.f32 %v439, %v507
        %v524 = vadd.f32 %v440, %v508
        %525 = vset.pattern.permute.xlu0 2
        %526 = vperm.xlu0 %525, %v363
        %v527 = vpop.permute.xlu0 %526
        %529 = vset.pattern.permute.xlu0 2
        %530 = vperm.xlu0 %529, %v364
        %v531 = vpop.permute.xlu0 %530
        %533 = vset.pattern.permute.xlu0 2
        %534 = vperm.xlu0 %533, %v365
        %v535 = vpop.permute.xlu0 %534
        %537 = vset.pattern.permute.xlu0 2
        %538 = vperm.xlu0 %537, %v366
        %v539 = vpop.permute.xlu0 %538
        %v541 = vlaneseq
        %v542 = vshrl.u32 %v541, 7
        %v543 = vsub.s32 2, %v542
        %v544 = vrot.slane %v361, %v543
        %v545 = vlaneseq
        %v546 = vshrl.u32 %v545, 7
        %v547 = vsub.s32 6, %v546
        %v548 = vrot.slane %v361, %v547
        %v549 = vlaneseq
        %v550 = vshrl.u32 %v549, 7
        %v551 = vsub.s32 2, %v550
        %v552 = vrot.slane %v362, %v551
        %v553 = vlaneseq
        %v554 = vshrl.u32 %v553, 7
        %v555 = vsub.s32 6, %v554
        %v556 = vrot.slane %v362, %v555
        %v561 = vlaneseq
        %v562 = vshrl.u32 %v561, 7
        %v563 = vsub.s32 2, %v562
        %v564 = vrot.slane %v544, %v563
        %v565 = vlaneseq
        %v566 = vshrl.u32 %v565, 7
        %v567 = vsub.s32 2, %v566
        %v568 = vrot.slane %v548, %v567
        %v569 = vlaneseq
        %v570 = vshrl.u32 %v569, 7
        %v571 = vsub.s32 2, %v570
        %v572 = vrot.slane %v552, %v571
        %v573 = vlaneseq
        %v574 = vshrl.u32 %v573, 7
        %v575 = vsub.s32 2, %v574
        %v576 = vrot.slane %v556, %v575
        %v577 = vmul.f32 %v527, %v564
        %v578 = vmul.f32 %v527, %v568
        %v579 = vmul.f32 %v527, %v572
        %v580 = vmul.f32 %v527, %v576
        %v581 = vmul.f32 %v531, %v564
        %v582 = vmul.f32 %v531, %v568
        %v583 = vmul.f32 %v531, %v572
        %v584 = vmul.f32 %v531, %v576
        %v585 = vmul.f32 %v535, %v564
        %v586 = vmul.f32 %v535, %v568
        %v587 = vmul.f32 %v535, %v572
        %v588 = vmul.f32 %v535, %v576
        %v589 = vmul.f32 %v539, %v564
        %v590 = vmul.f32 %v539, %v568
        %v591 = vmul.f32 %v539, %v572
        %v592 = vmul.f32 %v539, %v576
        %v593 = vadd.f32 %v509, %v577
        %v594 = vadd.f32 %v510, %v578
        %v595 = vadd.f32 %v511, %v579
        %v596 = vadd.f32 %v512, %v580
        %v597 = vadd.f32 %v513, %v581
        %v598 = vadd.f32 %v514, %v582
        %v599 = vadd.f32 %v515, %v583
        %v600 = vadd.f32 %v516, %v584
        %v601 = vadd.f32 %v517, %v585
        %v602 = vadd.f32 %v518, %v586
        %v603 = vadd.f32 %v519, %v587
        %v604 = vadd.f32 %v520, %v588
        %v605 = vadd.f32 %v521, %v589
        %v606 = vadd.f32 %v522, %v590
        %v607 = vadd.f32 %v523, %v591
        %v608 = vadd.f32 %v524, %v592
        %v609 = vld [vmem:[%s2] sm:$0xff]
        %v610 = vld [vmem:[%s2 + $0x8] sm:$0xff]
        %v611 = vld [vmem:[%s2 + $0x10] sm:$0xff]
        %v612 = vld [vmem:[%s2 + $0x18] sm:$0xff]
        %614 = vset.pattern.permute.xlu0 0
        %615 = vperm.xlu0 %614, %v609
        %v616 = vpop.permute.xlu0 %615
        %619 = vset.pattern.permute.xlu0 0
        %620 = vperm.xlu0 %619, %v610
        %v621 = vpop.permute.xlu0 %620
        %624 = vset.pattern.permute.xlu0 0
        %625 = vperm.xlu0 %624, %v611
        %v626 = vpop.permute.xlu0 %625
        %629 = vset.pattern.permute.xlu0 0
        %630 = vperm.xlu0 %629, %v612
        %v631 = vpop.permute.xlu0 %630
        %v633 = vadd.f32 %v593, %v616
        %v634 = vadd.f32 %v594, %v616
        %v635 = vadd.f32 %v595, %v616
        %v636 = vadd.f32 %v596, %v616
        %v637 = vadd.f32 %v597, %v621
        %v638 = vadd.f32 %v598, %v621
        %v639 = vadd.f32 %v599, %v621
        %v640 = vadd.f32 %v600, %v621
        %v641 = vadd.f32 %v601, %v626
        %v642 = vadd.f32 %v602, %v626
        %v643 = vadd.f32 %v603, %v626
        %v644 = vadd.f32 %v604, %v626
        %v645 = vadd.f32 %v605, %v631
        %v646 = vadd.f32 %v606, %v631
        %v647 = vadd.f32 %v607, %v631
        %v648 = vadd.f32 %v608, %v631
        %v649 = vtanh.pop %v633
        %v650 = vtanh.pop %v634
        %v651 = vtanh.pop %v635
        %v652 = vtanh.pop %v636
        %v653 = vtanh.pop %v637
        %v654 = vtanh.pop %v638
        %v655 = vtanh.pop %v639
        %v656 = vtanh.pop %v640
        %v657 = vtanh.pop %v641
        %v658 = vtanh.pop %v642
        %v659 = vtanh.pop %v643
        %v660 = vtanh.pop %v644
        %v661 = vtanh.pop %v645
        %v662 = vtanh.pop %v646
        %v663 = vtanh.pop %v647
        %v664 = vtanh.pop %v648
        %v665 = vld [vmem:[%s3] sm:$0xff]
        %v666 = vld [vmem:[%s3 + $0x8] sm:$0xff]
        %v667 = vld [vmem:[%s3 + $0x10] sm:$0xff]
        %v668 = vld [vmem:[%s3 + $0x18] sm:$0xff]
        %v669 = vld [vmem:[%s4] sm:$0xff]
        %v670 = vld [vmem:[%s4 + $0x8] sm:$0xff]
        %v671 = vld [vmem:[%s4 + $0x10] sm:$0xff]
        %v672 = vld [vmem:[%s4 + $0x18] sm:$0xff]
        %674 = vset.pattern.permute.xlu0 0
        %675 = vperm.xlu0 %674, %v669
        %v676 = vpop.permute.xlu0 %675
        %679 = vset.pattern.permute.xlu0 0
        %680 = vperm.xlu0 %679, %v670
        %v681 = vpop.permute.xlu0 %680
        %684 = vset.pattern.permute.xlu0 0
        %685 = vperm.xlu0 %684, %v671
        %v686 = vpop.permute.xlu0 %685
        %689 = vset.pattern.permute.xlu0 0
        %690 = vperm.xlu0 %689, %v672
        %v691 = vpop.permute.xlu0 %690
        %vm693 = vcmask 261120
        %v695 = vsel %vm693, %v665, 0
        %v698 = vsel %vm693, %v666, 0
        %v701 = vsel %vm693, %v667, 0
        %v704 = vsel %vm693, %v668, 0
        %706 = vmatprep.subr.mxu0 %v650
        %707 = vmatpush1.msra.mxu0 %v649
        %708 = vmatprep.subr.mxu0 %v654
        %709 = vmatpush1.msra.mxu0 %v653
        %710 = vmatprep.subr.mxu0 %v658
        %711 = vmatpush1.msra.mxu0 %v657
        %712 = vmatprep.subr.mxu0 %v662
        %713 = vmatpush1.msra.mxu0 %v661
        %714 = vmatprep.subr.mxu0 0.0
        %715 = vmatpush1.msra.mxu0 0.0
        %716 = vmatprep.subr.mxu0 0.0
        %717 = vmatpush1.msra.mxu0 0.0
        %718 = vmatprep.subr.mxu0 0.0
        %719 = vmatpush1.msra.mxu0 0.0
        %720 = vmatprep.subr.mxu0 0.0
        %721 = vmatpush1.msra.mxu0 0.0
        %722 = vmatprep.subr.mxu0 0.0
        %723 = vmatpush1.msra.mxu0 0.0
        %724 = vmatprep.subr.mxu0 0.0
        %725 = vmatpush1.msra.mxu0 0.0
        %726 = vmatprep.subr.mxu0 0.0
        %727 = vmatpush1.msra.mxu0 0.0
        %728 = vmatprep.subr.mxu0 0.0
        %729 = vmatpush1.msra.mxu0 0.0
        %730 = vmatprep.subr.mxu0 0.0
        %731 = vmatpush1.msra.mxu0 0.0
        %732 = vmatprep.subr.mxu0 0.0
        %733 = vmatpush1.msra.mxu0 0.0
        %734 = vmatprep.subr.mxu0 0.0
        %735 = vmatpush1.msra.mxu0 0.0
        %736 = vmatprep.subr.mxu0 0.0
        %737 = vmatpush1.msra.mxu0 0.0
        %738 = vmatprep.subr.mxu0 0.0
        %739 = vmatpush1.msra.mxu0 0.0
        %740 = vmatprep.subr.mxu0 0.0
        %741 = vmatpush1.msra.mxu0 0.0
        %742 = vmatprep.subr.mxu0 0.0
        %743 = vmatpush1.msra.mxu0 0.0
        %744 = vmatprep.subr.mxu0 0.0
        %745 = vmatpush1.msra.mxu0 0.0
        %746 = vmatprep.subr.mxu0 0.0
        %747 = vmatpush1.msra.mxu0 0.0
        %748 = vmatprep.subr.mxu0 0.0
        %749 = vmatpush1.msra.mxu0 0.0
        %750 = vmatprep.subr.mxu0 0.0
        %751 = vmatpush1.msra.mxu0 0.0
        %752 = vmatprep.subr.mxu0 0.0
        %753 = vmatpush1.msra.mxu0 0.0
        %754 = vmatprep.subr.mxu0 0.0
        %755 = vmatpush1.msra.mxu0 0.0
        %756 = vmatprep.subr.mxu0 0.0
        %757 = vmatpush1.msra.mxu0 0.0
        %758 = vmatprep.subr.mxu0 0.0
        %759 = vmatpush1.msra.mxu0 0.0
        %760 = vmatprep.subr.mxu0 0.0
        %761 = vmatpush1.msra.mxu0 0.0
        %762 = vmatprep.subr.mxu0 0.0
        %763 = vmatpush1.msra.mxu0 0.0
        %764 = vmatprep.subr.mxu0 0.0
        %765 = vmatpush1.msra.mxu0 0.0
        %766 = vmatprep.subr.mxu0 0.0
        %767 = vmatpush1.msra.mxu0 0.0
        %768 = vmatprep.subr.mxu0 0.0
        %769 = vmatpush1.msra.mxu0 0.0
        %770 = vmatprep.mubr.f32.mxu0 0.0
        %771 = vmatmul.mubr.f32.gmra.mrb[0].mxu0 %v695
        %v772 = vpop.f32.mrb[0].mxu0
        %v773 = vadd.f32 %v676, %v772
        %v774 = vpop.f32.mrb[0].mxu0
        %v775 = vadd.f32 %v676, %v774
        %776 = vmatprep.mubr.f32.mxu0 0.0
        %777 = vmatmul.mubr.f32.gmra.mrb[0].mxu0 %v698
        %v778 = vpop.f32.mrb[0].mxu0
        %v779 = vadd.f32 %v681, %v778
        %v780 = vpop.f32.mrb[0].mxu0
        %v781 = vadd.f32 %v681, %v780
        %782 = vmatprep.mubr.f32.mxu0 0.0
        %783 = vmatmul.mubr.f32.gmra.mrb[0].mxu0 %v701
        %v784 = vpop.f32.mrb[0].mxu0
        %v785 = vadd.f32 %v686, %v784
        %v786 = vpop.f32.mrb[0].mxu0
        %v787 = vadd.f32 %v686, %v786
        %788 = vmatprep.mubr.f32.mxu0 0.0
        %789 = vmatmul.mubr.f32.gmra.mrb[0].mxu0 %v704
        %v790 = vpop.f32.mrb[0].mxu0
        %v791 = vadd.f32 %v691, %v790
        %v792 = vpop.f32.mrb[0].mxu0
        %v793 = vadd.f32 %v691, %v792
        %794 = vdwg.mxu0
        %795 = vmatprep.subr.mxu0 %v652
        %796 = vmatpush1.msra.mxu0 %v651
        %797 = vmatprep.subr.mxu0 %v656
        %798 = vmatpush1.msra.mxu0 %v655
        %799 = vmatprep.subr.mxu0 %v660
        %800 = vmatpush1.msra.mxu0 %v659
        %801 = vmatprep.subr.mxu0 %v664
        %802 = vmatpush1.msra.mxu0 %v663
        %803 = vmatprep.subr.mxu0 0.0
        %804 = vmatpush1.msra.mxu0 0.0
        %805 = vmatprep.subr.mxu0 0.0
        %806 = vmatpush1.msra.mxu0 0.0
        %807 = vmatprep.subr.mxu0 0.0
        %808 = vmatpush1.msra.mxu0 0.0
        %809 = vmatprep.subr.mxu0 0.0
        %810 = vmatpush1.msra.mxu0 0.0
        %811 = vmatprep.subr.mxu0 0.0
        %812 = vmatpush1.msra.mxu0 0.0
        %813 = vmatprep.subr.mxu0 0.0
        %814 = vmatpush1.msra.mxu0 0.0
        %815 = vmatprep.subr.mxu0 0.0
        %816 = vmatpush1.msra.mxu0 0.0
        %817 = vmatprep.subr.mxu0 0.0
        %818 = vmatpush1.msra.mxu0 0.0
        %819 = vmatprep.subr.mxu0 0.0
        %820 = vmatpush1.msra.mxu0 0.0
        %821 = vmatprep.subr.mxu0 0.0
        %822 = vmatpush1.msra.mxu0 0.0
        %823 = vmatprep.subr.mxu0 0.0
        %824 = vmatpush1.msra.mxu0 0.0
        %825 = vmatprep.subr.mxu0 0.0
        %826 = vmatpush1.msra.mxu0 0.0
        %827 = vmatprep.subr.mxu0 0.0
        %828 = vmatpush1.msra.mxu0 0.0
        %829 = vmatprep.subr.mxu0 0.0
        %830 = vmatpush1.msra.mxu0 0.0
        %831 = vmatprep.subr.mxu0 0.0
        %832 = vmatpush1.msra.mxu0 0.0
        %833 = vmatprep.subr.mxu0 0.0
        %834 = vmatpush1.msra.mxu0 0.0
        %835 = vmatprep.subr.mxu0 0.0
        %836 = vmatpush1.msra.mxu0 0.0
        %837 = vmatprep.subr.mxu0 0.0
        %838 = vmatpush1.msra.mxu0 0.0
        %839 = vmatprep.subr.mxu0 0.0
        %840 = vmatpush1.msra.mxu0 0.0
        %841 = vmatprep.subr.mxu0 0.0
        %842 = vmatpush1.msra.mxu0 0.0
        %843 = vmatprep.subr.mxu0 0.0
        %844 = vmatpush1.msra.mxu0 0.0
        %845 = vmatprep.subr.mxu0 0.0
        %846 = vmatpush1.msra.mxu0 0.0
        %847 = vmatprep.subr.mxu0 0.0
        %848 = vmatpush1.msra.mxu0 0.0
        %849 = vmatprep.subr.mxu0 0.0
        %850 = vmatpush1.msra.mxu0 0.0
        %851 = vmatprep.subr.mxu0 0.0
        %852 = vmatpush1.msra.mxu0 0.0
        %853 = vmatprep.subr.mxu0 0.0
        %854 = vmatpush1.msra.mxu0 0.0
        %855 = vmatprep.subr.mxu0 0.0
        %856 = vmatpush1.msra.mxu0 0.0
        %857 = vmatprep.subr.mxu0 0.0
        %858 = vmatpush1.msra.mxu0 0.0
        %859 = vmatprep.mubr.f32.mxu0 0.0
        %860 = vmatmul.mubr.f32.gmra.mrb[0].mxu0 %v695
        %v861 = vpop.f32.mrb[0].mxu0
        %v862 = vadd.f32 %v676, %v861
        %v863 = vpop.f32.mrb[0].mxu0
        %v864 = vadd.f32 %v676, %v863
        %865 = vmatprep.mubr.f32.mxu0 0.0
        %866 = vmatmul.mubr.f32.gmra.mrb[0].mxu0 %v698
        %v867 = vpop.f32.mrb[0].mxu0
        %v868 = vadd.f32 %v681, %v867
        %v869 = vpop.f32.mrb[0].mxu0
        %v870 = vadd.f32 %v681, %v869
        %871 = vmatprep.mubr.f32.mxu0 0.0
        %872 = vmatmul.mubr.f32.gmra.mrb[0].mxu0 %v701
        %v873 = vpop.f32.mrb[0].mxu0
        %v874 = vadd.f32 %v686, %v873
        %v875 = vpop.f32.mrb[0].mxu0
        %v876 = vadd.f32 %v686, %v875
        %877 = vmatprep.mubr.f32.mxu0 0.0
        %878 = vmatmul.mubr.f32.gmra.mrb[0].mxu0 %v704
        %v879 = vpop.f32.mrb[0].mxu0
        %v880 = vadd.f32 %v691, %v879
        %v881 = vpop.f32.mrb[0].mxu0
        %v882 = vadd.f32 %v691, %v881
        %883 = vdwg.mxu0
        %v884 = vtanh.pop %v773
        %v885 = vtanh.pop %v775
        %v886 = vtanh.pop %v862
        %v887 = vtanh.pop %v864
        %v888 = vtanh.pop %v779
        %v889 = vtanh.pop %v781
        %v890 = vtanh.pop %v868
        %v891 = vtanh.pop %v870
        %v892 = vtanh.pop %v785
        %v893 = vtanh.pop %v787
        %v894 = vtanh.pop %v874
        %v895 = vtanh.pop %v876
        %v896 = vtanh.pop %v791
        %v897 = vtanh.pop %v793
        %v898 = vtanh.pop %v880
        %v899 = vtanh.pop %v882
        %v900 = vld [vmem:[%s5] sm:$0xff]
        %v901 = vld [vmem:[%s5 + $0x8] sm:$0xff]
        %v902 = vld [vmem:[%s5 + $0x10] sm:$0xff]
        %v903 = vld [vmem:[%s5 + $0x18] sm:$0xff]
        %v904 = vld [vmem:[%s6] sm:$0xff]
        %v905 = vld [vmem:[%s6 + $0x8] sm:$0xff]
        %v906 = vld [vmem:[%s6 + $0x10] sm:$0xff]
        %v907 = vld [vmem:[%s6 + $0x18] sm:$0xff]
        %909 = vset.pattern.permute.xlu0 0
        %910 = vperm.xlu0 %909, %v904
        %v911 = vpop.permute.xlu0 %910
        %914 = vset.pattern.permute.xlu0 0
        %915 = vperm.xlu0 %914, %v905
        %v916 = vpop.permute.xlu0 %915
        %919 = vset.pattern.permute.xlu0 0
        %920 = vperm.xlu0 %919, %v906
        %v921 = vpop.permute.xlu0 %920
        %924 = vset.pattern.permute.xlu0 0
        %925 = vperm.xlu0 %924, %v907
        %v926 = vpop.permute.xlu0 %925
        %v929 = vsel %vm693, %v900, 0
        %v932 = vsel %vm693, %v901, 0
        %v935 = vsel %vm693, %v902, 0
        %v938 = vsel %vm693, %v903, 0
        %940 = vmatprep.subr.mxu0 %v885
        %941 = vmatpush1.msra.mxu0 %v884
        %942 = vmatprep.subr.mxu0 %v889
        %943 = vmatpush1.msra.mxu0 %v888
        %944 = vmatprep.subr.mxu0 %v893
        %945 = vmatpush1.msra.mxu0 %v892
        %946 = vmatprep.subr.mxu0 %v897
        %947 = vmatpush1.msra.mxu0 %v896
        %948 = vmatprep.subr.mxu0 0.0
        %949 = vmatpush1.msra.mxu0 0.0
        %950 = vmatprep.subr.mxu0 0.0
        %951 = vmatpush1.msra.mxu0 0.0
        %952 = vmatprep.subr.mxu0 0.0
        %953 = vmatpush1.msra.mxu0 0.0
        %954 = vmatprep.subr.mxu0 0.0
        %955 = vmatpush1.msra.mxu0 0.0
        %956 = vmatprep.subr.mxu0 0.0
        %957 = vmatpush1.msra.mxu0 0.0
        %958 = vmatprep.subr.mxu0 0.0
        %959 = vmatpush1.msra.mxu0 0.0
        %960 = vmatprep.subr.mxu0 0.0
        %961 = vmatpush1.msra.mxu0 0.0
        %962 = vmatprep.subr.mxu0 0.0
        %963 = vmatpush1.msra.mxu0 0.0
        %964 = vmatprep.subr.mxu0 0.0
        %965 = vmatpush1.msra.mxu0 0.0
        %966 = vmatprep.subr.mxu0 0.0
        %967 = vmatpush1.msra.mxu0 0.0
        %968 = vmatprep.subr.mxu0 0.0
        %969 = vmatpush1.msra.mxu0 0.0
        %970 = vmatprep.subr.mxu0 0.0
        %971 = vmatpush1.msra.mxu0 0.0
        %972 = vmatprep.subr.mxu0 0.0
        %973 = vmatpush1.msra.mxu0 0.0
        %974 = vmatprep.subr.mxu0 0.0
        %975 = vmatpush1.msra.mxu0 0.0
        %976 = vmatprep.subr.mxu0 0.0
        %977 = vmatpush1.msra.mxu0 0.0
        %978 = vmatprep.subr.mxu0 0.0
        %979 = vmatpush1.msra.mxu0 0.0
        %980 = vmatprep.subr.mxu0 0.0
        %981 = vmatpush1.msra.mxu0 0.0
        %982 = vmatprep.subr.mxu0 0.0
        %983 = vmatpush1.msra.mxu0 0.0
        %984 = vmatprep.subr.mxu0 0.0
        %985 = vmatpush1.msra.mxu0 0.0
        %986 = vmatprep.subr.mxu0 0.0
        %987 = vmatpush1.msra.mxu0 0.0
        %988 = vmatprep.subr.mxu0 0.0
        %989 = vmatpush1.msra.mxu0 0.0
        %990 = vmatprep.subr.mxu0 0.0
        %991 = vmatpush1.msra.mxu0 0.0
        %992 = vmatprep.subr.mxu0 0.0
        %993 = vmatpush1.msra.mxu0 0.0
        %994 = vmatprep.subr.mxu0 0.0
        %995 = vmatpush1.msra.mxu0 0.0
        %996 = vmatprep.subr.mxu0 0.0
        %997 = vmatpush1.msra.mxu0 0.0
        %998 = vmatprep.subr.mxu0 0.0
        %999 = vmatpush1.msra.mxu0 0.0
        %1000 = vmatprep.subr.mxu0 0.0
        %1001 = vmatpush1.msra.mxu0 0.0
        %1002 = vmatprep.subr.mxu0 0.0
        %1003 = vmatpush1.msra.mxu0 0.0
        %1004 = vmatprep.mubr.f32.mxu0 0.0
        %1005 = vmatmul.mubr.f32.gmra.mrb[0].mxu0 %v929
        %v1006 = vpop.f32.mrb[0].mxu0
        %v1007 = vadd.f32 %v911, %v1006
        %v1008 = vpop.f32.mrb[0].mxu0
        %v1009 = vadd.f32 %v911, %v1008
        %1010 = vmatprep.mubr.f32.mxu0 0.0
        %1011 = vmatmul.mubr.f32.gmra.mrb[0].mxu0 %v932
        %v1012 = vpop.f32.mrb[0].mxu0
        %v1013 = vadd.f32 %v916, %v1012
        %v1014 = vpop.f32.mrb[0].mxu0
        %v1015 = vadd.f32 %v916, %v1014
        %1016 = vmatprep.mubr.f32.mxu0 0.0
        %1017 = vmatmul.mubr.f32.gmra.mrb[0].mxu0 %v935
        %v1018 = vpop.f32.mrb[0].mxu0
        %v1019 = vadd.f32 %v921, %v1018
        %v1020 = vpop.f32.mrb[0].mxu0
        %v1021 = vadd.f32 %v921, %v1020
        %1022 = vmatprep.mubr.f32.mxu0 0.0
        %1023 = vmatmul.mubr.f32.gmra.mrb[0].mxu0 %v938
        %v1024 = vpop.f32.mrb[0].mxu0
        %v1025 = vadd.f32 %v926, %v1024
        %v1026 = vpop.f32.mrb[0].mxu0
        %v1027 = vadd.f32 %v926, %v1026
        %1028 = vdwg.mxu0
        %1029 = vmatprep.subr.mxu0 %v887
        %1030 = vmatpush1.msra.mxu0 %v886
        %1031 = vmatprep.subr.mxu0 %v891
        %1032 = vmatpush1.msra.mxu0 %v890
        %1033 = vmatprep.subr.mxu0 %v895
        %1034 = vmatpush1.msra.mxu0 %v894
        %1035 = vmatprep.subr.mxu0 %v899
        %1036 = vmatpush1.msra.mxu0 %v898
        %1037 = vmatprep.subr.mxu0 0.0
        %1038 = vmatpush1.msra.mxu0 0.0
        %1039 = vmatprep.subr.mxu0 0.0
        %1040 = vmatpush1.msra.mxu0 0.0
        %1041 = vmatprep.subr.mxu0 0.0
        %1042 = vmatpush1.msra.mxu0 0.0
        %1043 = vmatprep.subr.mxu0 0.0
        %1044 = vmatpush1.msra.mxu0 0.0
        %1045 = vmatprep.subr.mxu0 0.0
        %1046 = vmatpush1.msra.mxu0 0.0
        %1047 = vmatprep.subr.mxu0 0.0
        %1048 = vmatpush1.msra.mxu0 0.0
        %1049 = vmatprep.subr.mxu0 0.0
        %1050 = vmatpush1.msra.mxu0 0.0
        %1051 = vmatprep.subr.mxu0 0.0
        %1052 = vmatpush1.msra.mxu0 0.0
        %1053 = vmatprep.subr.mxu0 0.0
        %1054 = vmatpush1.msra.mxu0 0.0
        %1055 = vmatprep.subr.mxu0 0.0
        %1056 = vmatpush1.msra.mxu0 0.0
        %1057 = vmatprep.subr.mxu0 0.0
        %1058 = vmatpush1.msra.mxu0 0.0
        %1059 = vmatprep.subr.mxu0 0.0
        %1060 = vmatpush1.msra.mxu0 0.0
        %1061 = vmatprep.subr.mxu0 0.0
        %1062 = vmatpush1.msra.mxu0 0.0
        %1063 = vmatprep.subr.mxu0 0.0
        %1064 = vmatpush1.msra.mxu0 0.0
        %1065 = vmatprep.subr.mxu0 0.0
        %1066 = vmatpush1.msra.mxu0 0.0
        %1067 = vmatprep.subr.mxu0 0.0
        %1068 = vmatpush1.msra.mxu0 0.0
        %1069 = vmatprep.subr.mxu0 0.0
        %1070 = vmatpush1.msra.mxu0 0.0
        %1071 = vmatprep.subr.mxu0 0.0
        %1072 = vmatpush1.msra.mxu0 0.0
        %1073 = vmatprep.subr.mxu0 0.0
        %1074 = vmatpush1.msra.mxu0 0.0
        %1075 = vmatprep.subr.mxu0 0.0
        %1076 = vmatpush1.msra.mxu0 0.0
        %1077 = vmatprep.subr.mxu0 0.0
        %1078 = vmatpush1.msra.mxu0 0.0
        %1079 = vmatprep.subr.mxu0 0.0
        %1080 = vmatpush1.msra.mxu0 0.0
        %1081 = vmatprep.subr.mxu0 0.0
        %1082 = vmatpush1.msra.mxu0 0.0
        %1083 = vmatprep.subr.mxu0 0.0
        %1084 = vmatpush1.msra.mxu0 0.0
        %1085 = vmatprep.subr.mxu0 0.0
        %1086 = vmatpush1.msra.mxu0 0.0
        %1087 = vmatprep.subr.mxu0 0.0
        %1088 = vmatpush1.msra.mxu0 0.0
        %1089 = vmatprep.subr.mxu0 0.0
        %1090 = vmatpush1.msra.mxu0 0.0
        %1091 = vmatprep.subr.mxu0 0.0
        %1092 = vmatpush1.msra.mxu0 0.0
        %1093 = vmatprep.mubr.f32.mxu0 0.0
        %1094 = vmatmul.mubr.f32.gmra.mrb[0].mxu0 %v929
        %v1095 = vpop.f32.mrb[0].mxu0
        %v1096 = vadd.f32 %v911, %v1095
        %v1097 = vpop.f32.mrb[0].mxu0
        %v1098 = vadd.f32 %v911, %v1097
        %1099 = vmatprep.mubr.f32.mxu0 0.0
        %1100 = vmatmul.mubr.f32.gmra.mrb[0].mxu0 %v932
        %v1101 = vpop.f32.mrb[0].mxu0
        %v1102 = vadd.f32 %v916, %v1101
        %v1103 = vpop.f32.mrb[0].mxu0
        %v1104 = vadd.f32 %v916, %v1103
        %1105 = vmatprep.mubr.f32.mxu0 0.0
        %1106 = vmatmul.mubr.f32.gmra.mrb[0].mxu0 %v935
        %v1107 = vpop.f32.mrb[0].mxu0
        %v1108 = vadd.f32 %v921, %v1107
        %v1109 = vpop.f32.mrb[0].mxu0
        %v1110 = vadd.f32 %v921, %v1109
        %1111 = vmatprep.mubr.f32.mxu0 0.0
        %1112 = vmatmul.mubr.f32.gmra.mrb[0].mxu0 %v938
        %v1113 = vpop.f32.mrb[0].mxu0
        %v1114 = vadd.f32 %v926, %v1113
        %v1115 = vpop.f32.mrb[0].mxu0
        %v1116 = vadd.f32 %v926, %v1115
        %1117 = vdwg.mxu0
        %v1118 = vtanh.pop %v1007
        %v1119 = vtanh.pop %v1009
        %v1120 = vtanh.pop %v1096
        %v1121 = vtanh.pop %v1098
        %v1122 = vtanh.pop %v1013
        %v1123 = vtanh.pop %v1015
        %v1124 = vtanh.pop %v1102
        %v1125 = vtanh.pop %v1104
        %v1126 = vtanh.pop %v1019
        %v1127 = vtanh.pop %v1021
        %v1128 = vtanh.pop %v1108
        %v1129 = vtanh.pop %v1110
        %v1130 = vtanh.pop %v1025
        %v1131 = vtanh.pop %v1027
        %v1132 = vtanh.pop %v1114
        %v1133 = vtanh.pop %v1116
        %v1134 = vld [vmem:[%s7] sm:$0xff]
        %v1135 = vld [vmem:[%s7 + $0x8] sm:$0xff]
        %v1136 = vld [vmem:[%s7 + $0x10] sm:$0xff]
        %v1137 = vld [vmem:[%s7 + $0x18] sm:$0xff]
        %v1138 = vld [vmem:[%s8] sm:$0xff]
        %v1139 = vld [vmem:[%s8 + $0x8] sm:$0xff]
        %v1140 = vld [vmem:[%s8 + $0x10] sm:$0xff]
        %v1141 = vld [vmem:[%s8 + $0x18] sm:$0xff]
        %1143 = vset.pattern.permute.xlu0 0
        %1144 = vperm.xlu0 %1143, %v1138
        %v1145 = vpop.permute.xlu0 %1144
        %1148 = vset.pattern.permute.xlu0 0
        %1149 = vperm.xlu0 %1148, %v1139
        %v1150 = vpop.permute.xlu0 %1149
        %1153 = vset.pattern.permute.xlu0 0
        %1154 = vperm.xlu0 %1153, %v1140
        %v1155 = vpop.permute.xlu0 %1154
        %1158 = vset.pattern.permute.xlu0 0
        %1159 = vperm.xlu0 %1158, %v1141
        %v1160 = vpop.permute.xlu0 %1159
        %v1163 = vsel %vm693, %v1134, 0
        %v1166 = vsel %vm693, %v1135, 0
        %v1169 = vsel %vm693, %v1136, 0
        %v1172 = vsel %vm693, %v1137, 0
        %1174 = vmatprep.subr.mxu0 %v1119
        %1175 = vmatpush1.msra.mxu0 %v1118
        %1176 = vmatprep.subr.mxu0 %v1123
        %1177 = vmatpush1.msra.mxu0 %v1122
        %1178 = vmatprep.subr.mxu0 %v1127
        %1179 = vmatpush1.msra.mxu0 %v1126
        %1180 = vmatprep.subr.mxu0 %v1131
        %1181 = vmatpush1.msra.mxu0 %v1130
        %1182 = vmatprep.subr.mxu0 0.0
        %1183 = vmatpush1.msra.mxu0 0.0
        %1184 = vmatprep.subr.mxu0 0.0
        %1185 = vmatpush1.msra.mxu0 0.0
        %1186 = vmatprep.subr.mxu0 0.0
        %1187 = vmatpush1.msra.mxu0 0.0
        %1188 = vmatprep.subr.mxu0 0.0
        %1189 = vmatpush1.msra.mxu0 0.0
        %1190 = vmatprep.subr.mxu0 0.0
        %1191 = vmatpush1.msra.mxu0 0.0
        %1192 = vmatprep.subr.mxu0 0.0
        %1193 = vmatpush1.msra.mxu0 0.0
        %1194 = vmatprep.subr.mxu0 0.0
        %1195 = vmatpush1.msra.mxu0 0.0
        %1196 = vmatprep.subr.mxu0 0.0
        %1197 = vmatpush1.msra.mxu0 0.0
        %1198 = vmatprep.subr.mxu0 0.0
        %1199 = vmatpush1.msra.mxu0 0.0
        %1200 = vmatprep.subr.mxu0 0.0
        %1201 = vmatpush1.msra.mxu0 0.0
        %1202 = vmatprep.subr.mxu0 0.0
        %1203 = vmatpush1.msra.mxu0 0.0
        %1204 = vmatprep.subr.mxu0 0.0
        %1205 = vmatpush1.msra.mxu0 0.0
        %1206 = vmatprep.subr.mxu0 0.0
        %1207 = vmatpush1.msra.mxu0 0.0
        %1208 = vmatprep.subr.mxu0 0.0
        %1209 = vmatpush1.msra.mxu0 0.0
        %1210 = vmatprep.subr.mxu0 0.0
        %1211 = vmatpush1.msra.mxu0 0.0
        %1212 = vmatprep.subr.mxu0 0.0
        %1213 = vmatpush1.msra.mxu0 0.0
        %1214 = vmatprep.subr.mxu0 0.0
        %1215 = vmatpush1.msra.mxu0 0.0
        %1216 = vmatprep.subr.mxu0 0.0
        %1217 = vmatpush1.msra.mxu0 0.0
        %1218 = vmatprep.subr.mxu0 0.0
        %1219 = vmatpush1.msra.mxu0 0.0
        %1220 = vmatprep.subr.mxu0 0.0
        %1221 = vmatpush1.msra.mxu0 0.0
        %1222 = vmatprep.subr.mxu0 0.0
        %1223 = vmatpush1.msra.mxu0 0.0
        %1224 = vmatprep.subr.mxu0 0.0
        %1225 = vmatpush1.msra.mxu0 0.0
        %1226 = vmatprep.subr.mxu0 0.0
        %1227 = vmatpush1.msra.mxu0 0.0
        %1228 = vmatprep.subr.mxu0 0.0
        %1229 = vmatpush1.msra.mxu0 0.0
        %1230 = vmatprep.subr.mxu0 0.0
        %1231 = vmatpush1.msra.mxu0 0.0
        %1232 = vmatprep.subr.mxu0 0.0
        %1233 = vmatpush1.msra.mxu0 0.0
        %1234 = vmatprep.subr.mxu0 0.0
        %1235 = vmatpush1.msra.mxu0 0.0
        %1236 = vmatprep.subr.mxu0 0.0
        %1237 = vmatpush1.msra.mxu0 0.0
        %1238 = vmatprep.mubr.f32.mxu0 0.0
        %1239 = vmatmul.mubr.f32.gmra.mrb[0].mxu0 %v1163
        %v1240 = vpop.f32.mrb[0].mxu0
        %v1241 = vadd.f32 %v1145, %v1240
        %v1242 = vpop.f32.mrb[0].mxu0
        %v1243 = vadd.f32 %v1145, %v1242
        %1244 = vmatprep.mubr.f32.mxu0 0.0
        %1245 = vmatmul.mubr.f32.gmra.mrb[0].mxu0 %v1166
        %v1246 = vpop.f32.mrb[0].mxu0
        %v1247 = vadd.f32 %v1150, %v1246
        %v1248 = vpop.f32.mrb[0].mxu0
        %v1249 = vadd.f32 %v1150, %v1248
        %1250 = vmatprep.mubr.f32.mxu0 0.0
        %1251 = vmatmul.mubr.f32.gmra.mrb[0].mxu0 %v1169
        %v1252 = vpop.f32.mrb[0].mxu0
        %v1253 = vadd.f32 %v1155, %v1252
        %v1254 = vpop.f32.mrb[0].mxu0
        %v1255 = vadd.f32 %v1155, %v1254
        %1256 = vmatprep.mubr.f32.mxu0 0.0
        %1257 = vmatmul.mubr.f32.gmra.mrb[0].mxu0 %v1172
        %v1258 = vpop.f32.mrb[0].mxu0
        %v1259 = vadd.f32 %v1160, %v1258
        %v1260 = vpop.f32.mrb[0].mxu0
        %v1261 = vadd.f32 %v1160, %v1260
        %1262 = vdwg.mxu0
        %1263 = vmatprep.subr.mxu0 %v1121
        %1264 = vmatpush1.msra.mxu0 %v1120
        %1265 = vmatprep.subr.mxu0 %v1125
        %1266 = vmatpush1.msra.mxu0 %v1124
        %1267 = vmatprep.subr.mxu0 %v1129
        %1268 = vmatpush1.msra.mxu0 %v1128
        %1269 = vmatprep.subr.mxu0 %v1133
        %1270 = vmatpush1.msra.mxu0 %v1132
        %1271 = vmatprep.subr.mxu0 0.0
        %1272 = vmatpush1.msra.mxu0 0.0
        %1273 = vmatprep.subr.mxu0 0.0
        %1274 = vmatpush1.msra.mxu0 0.0
        %1275 = vmatprep.subr.mxu0 0.0
        %1276 = vmatpush1.msra.mxu0 0.0
        %1277 = vmatprep.subr.mxu0 0.0
        %1278 = vmatpush1.msra.mxu0 0.0
        %1279 = vmatprep.subr.mxu0 0.0
        %1280 = vmatpush1.msra.mxu0 0.0
        %1281 = vmatprep.subr.mxu0 0.0
        %1282 = vmatpush1.msra.mxu0 0.0
        %1283 = vmatprep.subr.mxu0 0.0
        %1284 = vmatpush1.msra.mxu0 0.0
        %1285 = vmatprep.subr.mxu0 0.0
        %1286 = vmatpush1.msra.mxu0 0.0
        %1287 = vmatprep.subr.mxu0 0.0
        %1288 = vmatpush1.msra.mxu0 0.0
        %1289 = vmatprep.subr.mxu0 0.0
        %1290 = vmatpush1.msra.mxu0 0.0
        %1291 = vmatprep.subr.mxu0 0.0
        %1292 = vmatpush1.msra.mxu0 0.0
        %1293 = vmatprep.subr.mxu0 0.0
        %1294 = vmatpush1.msra.mxu0 0.0
        %1295 = vmatprep.subr.mxu0 0.0
        %1296 = vmatpush1.msra.mxu0 0.0
        %1297 = vmatprep.subr.mxu0 0.0
        %1298 = vmatpush1.msra.mxu0 0.0
        %1299 = vmatprep.subr.mxu0 0.0
        %1300 = vmatpush1.msra.mxu0 0.0
        %1301 = vmatprep.subr.mxu0 0.0
        %1302 = vmatpush1.msra.mxu0 0.0
        %1303 = vmatprep.subr.mxu0 0.0
        %1304 = vmatpush1.msra.mxu0 0.0
        %1305 = vmatprep.subr.mxu0 0.0
        %1306 = vmatpush1.msra.mxu0 0.0
        %1307 = vmatprep.subr.mxu0 0.0
        %1308 = vmatpush1.msra.mxu0 0.0
        %1309 = vmatprep.subr.mxu0 0.0
        %1310 = vmatpush1.msra.mxu0 0.0
        %1311 = vmatprep.subr.mxu0 0.0
        %1312 = vmatpush1.msra.mxu0 0.0
        %1313 = vmatprep.subr.mxu0 0.0
        %1314 = vmatpush1.msra.mxu0 0.0
        %1315 = vmatprep.subr.mxu0 0.0
        %1316 = vmatpush1.msra.mxu0 0.0
        %1317 = vmatprep.subr.mxu0 0.0
        %1318 = vmatpush1.msra.mxu0 0.0
        %1319 = vmatprep.subr.mxu0 0.0
        %1320 = vmatpush1.msra.mxu0 0.0
        %1321 = vmatprep.subr.mxu0 0.0
        %1322 = vmatpush1.msra.mxu0 0.0
        %1323 = vmatprep.subr.mxu0 0.0
        %1324 = vmatpush1.msra.mxu0 0.0
        %1325 = vmatprep.subr.mxu0 0.0
        %1326 = vmatpush1.msra.mxu0 0.0
        %1327 = vmatprep.mubr.f32.mxu0 0.0
        %1328 = vmatmul.mubr.f32.gmra.mrb[0].mxu0 %v1163
        %v1329 = vpop.f32.mrb[0].mxu0
        %v1330 = vadd.f32 %v1145, %v1329
        %v1331 = vpop.f32.mrb[0].mxu0
        %v1332 = vadd.f32 %v1145, %v1331
        %1333 = vmatprep.mubr.f32.mxu0 0.0
        %1334 = vmatmul.mubr.f32.gmra.mrb[0].mxu0 %v1166
        %v1335 = vpop.f32.mrb[0].mxu0
        %v1336 = vadd.f32 %v1150, %v1335
        %v1337 = vpop.f32.mrb[0].mxu0
        %v1338 = vadd.f32 %v1150, %v1337
        %1339 = vmatprep.mubr.f32.mxu0 0.0
        %1340 = vmatmul.mubr.f32.gmra.mrb[0].mxu0 %v1169
        %v1341 = vpop.f32.mrb[0].mxu0
        %v1342 = vadd.f32 %v1155, %v1341
        %v1343 = vpop.f32.mrb[0].mxu0
        %v1344 = vadd.f32 %v1155, %v1343
        %1345 = vmatprep.mubr.f32.mxu0 0.0
        %1346 = vmatmul.mubr.f32.gmra.mrb[0].mxu0 %v1172
        %v1347 = vpop.f32.mrb[0].mxu0
        %v1348 = vadd.f32 %v1160, %v1347
        %v1349 = vpop.f32.mrb[0].mxu0
        %v1350 = vadd.f32 %v1160, %v1349
        %1351 = vdwg.mxu0
        %v1352 = vtanh.pop %v1241
        %v1353 = vtanh.pop %v1243
        %v1354 = vtanh.pop %v1330
        %v1355 = vtanh.pop %v1332
        %v1356 = vtanh.pop %v1247
        %v1357 = vtanh.pop %v1249
        %v1358 = vtanh.pop %v1336
        %v1359 = vtanh.pop %v1338
        %v1360 = vtanh.pop %v1253
        %v1361 = vtanh.pop %v1255
        %v1362 = vtanh.pop %v1342
        %v1363 = vtanh.pop %v1344
        %v1364 = vtanh.pop %v1259
        %v1365 = vtanh.pop %v1261
        %v1366 = vtanh.pop %v1348
        %v1367 = vtanh.pop %v1350
        %v1368 = vld [vmem:[%s9] sm:$0xff]
        %v1369 = vld [vmem:[%s9 + $0x8] sm:$0xff]
        %v1370 = vld [vmem:[%s9 + $0x10] sm:$0xff]
        %v1371 = vld [vmem:[%s9 + $0x18] sm:$0xff]
        %1373 = vset.pattern.permute.xlu0 0
        %1374 = vperm.xlu0 %1373, %v1368
        %v1375 = vpop.permute.xlu0 %1374
        %1378 = vset.pattern.permute.xlu0 0
        %1379 = vperm.xlu0 %1378, %v1369
        %v1380 = vpop.permute.xlu0 %1379
        %1383 = vset.pattern.permute.xlu0 0
        %1384 = vperm.xlu0 %1383, %v1370
        %v1385 = vpop.permute.xlu0 %1384
        %1388 = vset.pattern.permute.xlu0 0
        %1389 = vperm.xlu0 %1388, %v1371
        %v1390 = vpop.permute.xlu0 %1389
        %v1392 = vmul.f32 %v1352, %v1375
        %v1393 = vmul.f32 %v1353, %v1375
        %v1394 = vmul.f32 %v1354, %v1375
        %v1395 = vmul.f32 %v1355, %v1375
        %v1396 = vmul.f32 %v1356, %v1380
        %v1397 = vmul.f32 %v1357, %v1380
        %v1398 = vmul.f32 %v1358, %v1380
        %v1399 = vmul.f32 %v1359, %v1380
        %v1400 = vmul.f32 %v1360, %v1385
        %v1401 = vmul.f32 %v1361, %v1385
        %v1402 = vmul.f32 %v1362, %v1385
        %v1403 = vmul.f32 %v1363, %v1385
        %v1404 = vmul.f32 %v1364, %v1390
        %v1405 = vmul.f32 %v1365, %v1390
        %v1406 = vmul.f32 %v1366, %v1390
        %v1407 = vmul.f32 %v1367, %v1390
        %v1408 = vadd.f32 %v1392, %v1396
        %v1409 = vadd.f32 %v1408, %v1400
        %v1410 = vadd.f32 %v1409, %v1404
        %v1411 = vrot.slane %v1410, 4
        %v1412 = vadd.f32 %v1410, %v1411
        %v1413 = vrot.slane %v1412, 2
        %v1414 = vadd.f32 %v1412, %v1413
        %v1415 = vrot.slane %v1414, 1
        %v1416 = vadd.f32 %v1414, %v1415
        %v1417 = vadd.f32 %v1393, %v1397
        %v1418 = vadd.f32 %v1417, %v1401
        %v1419 = vadd.f32 %v1418, %v1405
        %v1420 = vrot.slane %v1419, 4
        %v1421 = vadd.f32 %v1419, %v1420
        %v1422 = vrot.slane %v1421, 2
        %v1423 = vadd.f32 %v1421, %v1422
        %v1424 = vrot.slane %v1423, 1
        %v1425 = vadd.f32 %v1423, %v1424
        %v1426 = vadd.f32 %v1394, %v1398
        %v1427 = vadd.f32 %v1426, %v1402
        %v1428 = vadd.f32 %v1427, %v1406
        %v1429 = vrot.slane %v1428, 4
        %v1430 = vadd.f32 %v1428, %v1429
        %v1431 = vrot.slane %v1430, 2
        %v1432 = vadd.f32 %v1430, %v1431
        %v1433 = vrot.slane %v1432, 1
        %v1434 = vadd.f32 %v1432, %v1433
        %v1435 = vadd.f32 %v1395, %v1399
        %v1436 = vadd.f32 %v1435, %v1403
        %v1437 = vadd.f32 %v1436, %v1407
        %v1438 = vrot.slane %v1437, 4
        %v1439 = vadd.f32 %v1437, %v1438
        %v1440 = vrot.slane %v1439, 2
        %v1441 = vadd.f32 %v1439, %v1440
        %v1442 = vrot.slane %v1441, 1
        %v1443 = vadd.f32 %v1441, %v1442
        %v1448 = vcombine.low %v1416, %v1425
        %v1449 = vcombine.low %v1434, %v1443
        %v1451 = vunpack.c.l.s4 1966171168
        %v1452 = vunpack.c.0.s8 %v1451
        %v1453 = vlaneseq
        %v1454 = vshrl.u32 %v1453, 7
        %v1455 = vsub.s32 %v1452, %v1454
        %v1456 = vrot.slane %v1448, %v1455
        %v1458 = vunpack.c.l.s4 1966171168
        %v1459 = vunpack.c.0.s8 %v1458
        %v1460 = vlaneseq
        %v1461 = vshrl.u32 %v1460, 7
        %v1462 = vsub.s32 %v1459, %v1461
        %v1463 = vrot.slane %v1449, %v1462
        %v1464 = vcombine.low %v1456, %v1463
        %v1466 = vunpack.c.l.s4 1966171168
        %v1467 = vunpack.c.0.s8 %v1466
        %v1468 = vlaneseq
        %v1469 = vshrl.u32 %v1468, 7
        %v1470 = vsub.s32 %v1467, %v1469
        %v1471 = vrot.slane %v1464, %v1470
        %v1473 = vlaneseq
        %vm1474 = vcmp.ge.s32.totalorder %v1473, 0
        %vm1475 = vcmp.lt.s32.totalorder %v1473, 512
        %vm1476 = vmand %vm1474, %vm1475
        %1477 = vst.msk [vmem:[%s353] sm:$0xf] %vm1476, %v1471
        %s1478 = sand.u32 %s247, 1
        %s1479 = scalar_lea.sflag [#allocation3], %s1478
        %s1480 = sand.u32 %s247, 1
        %s1481 = smul.addr %s1480, 4
        %s1482 = scalar_lea.vmem [#allocation2], %s1481
        // Predicated region
        $region61: #{tpu_custom_call.1} parent=59 // pred_check
          %p1483 = pneg %p257
        $region62: #{tpu_custom_call.1} parent=59 // pred_check_branch
          %1485 = sbr.rel (%p1483) target = $region64
        $region63: #{tpu_custom_call.1} parent=59 // pred_region
          %s1486 = smul.u32 4, %s24
          %s1488 = ssub.s32 64, 64
          %1489 = vsyncadd %s1479, %s1488
          %s1490 = smul.addr %s1486, 16
          %s1491 = scalar_lea.hbm %s10, %s1490
          %s1493 = sshll.u32 %s1482, 4
          %s1494 = int_to_ptr.vmem [resolvable:$true] %s1493
          %1496 = dma.vmem_to_hbm [thread:$0]  %s1494, 64, %s1491, %s1479
        $region64: #{tpu_custom_call.1} parent=59 // pred_fallthru
          _
      $region60: #{tpu_custom_call.1} parent=5 // pred_fallthru
        _
      %p1497 = scmp.le.s32.totalorder 2, %s19
      // Predicated region
      $region65: #{tpu_custom_call.1} parent=5 // pred_check
        %p1498 = pneg %p1497
      $region66: #{tpu_custom_call.1} parent=5 // pred_check_branch
        %1500 = sbr.rel (%p1498) target = $region68
      $region67: #{tpu_custom_call.1} parent=5 // pred_region
        %s1501 = ssub.s32 %s19, 2
        // Predicated region
        $region69: #{tpu_custom_call.1} parent=67 // pred_check
          %p1502 = pneg %p263
        $region70: #{tpu_custom_call.1} parent=67 // pred_check_branch
          %1504 = sbr.rel (%p1502) target = $region72
        $region71: #{tpu_custom_call.1} parent=67 // pred_region
          %s1505 = sand.u32 %s248, 1
          %s1506 = scalar_lea.sflag [#allocation3], %s1505
          %s1507 = sand.u32 %s248, 1
          %s1508 = smul.addr %s1507, 4
          %s1509 = scalar_lea.vmem [#allocation2], %s1508
          %1510 = dma.done %s1506, 64
        $region72: #{tpu_custom_call.1} parent=67 // pred_fallthru
          _
      $region68: #{tpu_custom_call.1} parent=5 // pred_fallthru
        _
    $region6: #{tpu_custom_call.1} parent=1 // loop_footer
      %s23 = sadd.s32 1, %s19
    $region7: #{tpu_custom_call.1} parent=1 // loop_footer_branch
      %18 = sbr.rel target = $region3
    $region8: #{tpu_custom_call.1} parent=1 // loop_exit
      _
    %1511 = vsyncpa [#allocation3], 1
    %s1512 = scalar_lea.sflag [#allocation3], 1
    %1513 = vsyncpa %s1512, 1

</llo_original>
